<compile_context>
chip_gen: v5e
topology: v5e:2x2
jax: 0.10.0
libtpu: 0.0.40
codegen_flags: <defaults>
</compile_context>

<pallas_src>
import functools

import jax
import jax.numpy as jnp
from jax.experimental import pallas as pl
from jax.experimental.pallas import tpu as pltpu

GATE = 128  # lane-aligned width of each packed gate segment (r, z, n)


def _up8(n):
    return -(-n // 8) * 8


def _slab_layout(in_size, hidden):
    """Row offsets of each parameter block inside the packed (rows, 3*GATE) slab."""
    r_wi = 0
    r_wh = r_wi + _up8(in_size)       # W_ih^T block
    r_b = r_wh + _up8(hidden)         # bias block (8 rows)
    r_w1 = r_b + 8                    # W_fc1^T
    r_w2 = r_w1 + _up8(hidden)        # W_fc2^T
    r_w3 = r_w2 + _up8(2 * hidden)    # W_fc3^T
    rows = r_w3 + _up8(2 * hidden)
    return r_wi, r_wh, r_b, r_w1, r_w2, r_w3, rows


# ----------------------------- Pallas kernel --------------------------------
def gru_mlp_kernel(x_ref,      # (B, T, I)  f32 input, natural layout
                   slab_ref,   # (rows, 3*GATE) f32 packed parameter slab
                   out_ref,    # (B, L)
                   *, batch, seq, in_size, hidden, labels, apply_softmax):
    B, T, I, H, L = batch, seq, in_size, hidden, labels
    G = GATE
    H2 = 2 * H
    r_wi, r_wh, r_b, r_w1, r_w2, r_w3, _ = _slab_layout(I, H)

    # ---- one-time unpack of the parameter slab (static, aligned slices) ----
    wi = slab_ref[r_wi:r_wi + I, :].astype(jnp.bfloat16)         # (I, 3G)
    wh = slab_ref[r_wh:r_wh + H, :].astype(jnp.bfloat16)         # (H, 3G)
    bi = slab_ref[r_b:r_b + 1, :]                                # (1, 3G) r/z pre-summed
    bhn = slab_ref[r_b + 1:r_b + 2, 0:H]                         # (1, H)  n hidden bias
    b1 = slab_ref[r_b + 2:r_b + 3, 0:H2]                         # (1, 2H)
    b2 = slab_ref[r_b + 3:r_b + 4, 0:H2]                         # (1, 2H)
    b3 = slab_ref[r_b + 4:r_b + 5, 0:L]                          # (1, L)
    w1 = slab_ref[r_w1:r_w1 + H, 0:H2]                           # (H, 2H)  f32
    w2 = slab_ref[r_w2:r_w2 + H2, 0:H2]                          # (2H, 2H) f32
    w3 = slab_ref[r_w3:r_w3 + H2, 0:L]                           # (2H, L)  f32

    # ---- hoisted input projection: ONE MXU pass for all T*B rows, all 3 gates ----
    # Flatten x batch-major in-kernel (sublane concat; no wrapper transpose).
    x2d = jnp.concatenate([x_ref[b] for b in range(B)], axis=0)  # (B*T, I)
    gi_all = (jnp.dot(x2d.astype(jnp.bfloat16), wi,
                      preferred_element_type=jnp.float32) + bi)  # (B*T, 3G) f32

    def gi_at(t):  # rows {b*T + t}: static single-row slices + sublane concat
        return jnp.concatenate(
            [gi_all[b * T + t:b * T + t + 1, :] for b in range(B)], axis=0)  # (B, 3G)

    # ---- peeled t = 0: h == 0, so the hidden matmul is identically zero ----
    gi0 = gi_at(0)
    r = jax.nn.sigmoid(gi0[:, 0:H])
    z = jax.nn.sigmoid(gi0[:, G:G + H])
    n = jnp.tanh(gi0[:, 2 * G:2 * G + H] + r * bhn)
    h = (1.0 - z) * n                                            # (B, H) f32
    m = h                                                        # running max over time

    # ---- remaining steps, fully unrolled (T static & tiny) ----
    # Per step: one fused bf16 MXU matmul covering all 3 gates + 2 sigmoid + 1 tanh
    # (EUP) + a few VPU gating ops.  Gate slices start at lane offsets 0/128/256.
    for t in range(1, T):
        gh = jnp.dot(h.astype(jnp.bfloat16), wh,
                     preferred_element_type=jnp.float32)         # (B, 3G)
        gi = gi_at(t)
        r = jax.nn.sigmoid(gi[:, 0:H] + gh[:, 0:H])
        z = jax.nn.sigmoid(gi[:, G:G + H] + gh[:, G:G + H])
        n = jnp.tanh(gi[:, 2 * G:2 * G + H] + r * (gh[:, 2 * G:2 * G + H] + bhn))
        h = (1.0 - z) * n + z * h
        m = jnp.maximum(m, h)

    # ---- MLP head: fc1 -> relu -> fc2 -> relu -> fc3 (f32, off the serial path) ----
    h1 = jnp.maximum(jnp.dot(m, w1, preferred_element_type=jnp.float32) + b1, 0.0)
    h2 = jnp.maximum(jnp.dot(h1, w2, preferred_element_type=jnp.float32) + b2, 0.0)
    logits = jnp.dot(h2, w3, preferred_element_type=jnp.float32) + b3

    if apply_softmax:
        mx = jnp.max(logits, axis=-1, keepdims=True)
        e = jnp.exp(logits - mx)
        logits = e / jnp.sum(e, axis=-1, keepdims=True)          # exact (review note)

    out_ref[...] = logits.astype(out_ref.dtype)


# ------------------------ One-time parameter packing -------------------------
def pack_params(params):
    """Pack all PyTorch-layout weights into ONE aligned f32 slab (done once).

    Slab rows (all block offsets 8-aligned, 3*GATE lanes wide):
      [r_wi : r_wi+I ]  W_ih^T, gate-packed (r|z|n at lane offsets 0/128/256)
      [r_wh : r_wh+H ]  W_hh^T, gate-packed
      [r_b  : r_b+5  ]  biases: row0 = gate-packed (b_ir+b_hr | b_iz+b_hz | b_in),
                        row1 = b_hn, row2 = b_fc1, row3 = b_fc2, row4 = b_fc3
      [r_w1 : r_w1+H ]  W_fc1^T (H, 2H); [r_w2 ...] W_fc2^T (2H, 2H); [r_w3 ...] W_fc3^T (2H, L)
    """
    w_ih = jnp.asarray(params["w_ih"], jnp.float32)   # (3H, I)
    w_hh = jnp.asarray(params["w_hh"], jnp.float32)   # (3H, H)
    b_ih = jnp.asarray(params["b_ih"], jnp.float32)   # (3H,)
    b_hh = jnp.asarray(params["b_hh"], jnp.float32)   # (3H,)
    H = w_hh.shape[1]
    I = w_ih.shape[1]
    L = jnp.asarray(params["w_fc3"]).shape[0]
    G = GATE
    assert H <= G, "gate segment width must cover the hidden size"

    r_wi, r_wh, r_b, r_w1, r_w2, r_w3, rows = _slab_layout(I, H)
    slab = jnp.zeros((rows, 3 * G), jnp.float32)
    for g in range(3):   # PyTorch GRU gate order: r, z, n
        slab = slab.at[r_wi:r_wi + I, g * G:g * G + H].set(w_ih[g * H:(g + 1) * H, :].T)
        slab = slab.at[r_wh:r_wh + H, g * G:g * G + H].set(w_hh[g * H:(g + 1) * H, :].T)
    slab = slab.at[r_b, 0 * G:0 * G + H].set(b_ih[0:H] + b_hh[0:H])            # r: pre-summed
    slab = slab.at[r_b, 1 * G:1 * G + H].set(b_ih[H:2 * H] + b_hh[H:2 * H])    # z: pre-summed
    slab = slab.at[r_b, 2 * G:2 * G + H].set(b_ih[2 * H:3 * H])                # n: input bias
    slab = slab.at[r_b + 1, 0:H].set(b_hh[2 * H:3 * H])                        # n: hidden bias
    slab = slab.at[r_b + 2, 0:2 * H].set(jnp.asarray(params["b_fc1"], jnp.float32))
    slab = slab.at[r_b + 3, 0:2 * H].set(jnp.asarray(params["b_fc2"], jnp.float32))
    slab = slab.at[r_b + 4, 0:L].set(jnp.asarray(params["b_fc3"], jnp.float32))
    slab = slab.at[r_w1:r_w1 + H, 0:2 * H].set(jnp.asarray(params["w_fc1"], jnp.float32).T)
    slab = slab.at[r_w2:r_w2 + 2 * H, 0:2 * H].set(jnp.asarray(params["w_fc2"], jnp.float32).T)
    slab = slab.at[r_w3:r_w3 + 2 * H, 0:L].set(jnp.asarray(params["w_fc3"], jnp.float32).T)

    return {"slab": slab, "dims": (int(I), int(H), int(L))}


# ------------------------------- Forward -------------------------------------
@functools.partial(jax.jit, static_argnames=("dims", "softmax"))
def _forward(x, slab, *, dims, softmax):
    I, H, L = dims
    B, T, _ = x.shape
    kernel = functools.partial(
        gru_mlp_kernel, batch=B, seq=T, in_size=I, hidden=H, labels=L,
        apply_softmax=softmax)
    vmem = pl.BlockSpec(memory_space=pltpu.MemorySpace.VMEM)
    return pl.pallas_call(
        kernel,
        out_shape=jax.ShapeDtypeStruct((B, L), jnp.float32),
        in_specs=[vmem, vmem],
        out_specs=vmem,
    )(x.astype(jnp.float32), slab)


def simple_head_pose_forward(x, packed, softmax=False):
    """x: (B, T, I).  packed: output of pack_params.  Returns (B, L)."""
    return _forward(x, packed["slab"], dims=packed["dims"], softmax=bool(softmax))


# ------------------------ Pure-JAX reference (check) -------------------------
def reference_forward(x, params, softmax=False):
    B, T, I = x.shape
    H = params["w_hh"].shape[1]
    w_ih, w_hh, b_ih, b_hh = (params["w_ih"], params["w_hh"],
                              params["b_ih"], params["b_hh"])

    def cell(h, x_t):
        gi = x_t @ w_ih.T + b_ih
        gh = h @ w_hh.T + b_hh
        i_r, i_z, i_n = gi[:, :H], gi[:, H:2 * H], gi[:, 2 * H:]
        h_r, h_z, h_n = gh[:, :H], gh[:, H:2 * H], gh[:, 2 * H:]
        r = jax.nn.sigmoid(i_r + h_r)
        z = jax.nn.sigmoid(i_z + h_z)
        n = jnp.tanh(i_n + r * h_n)
        h_new = (1.0 - z) * n + z * h
        return h_new, h_new

    h0 = jnp.zeros((B, H), jnp.float32)
    _, hs = jax.lax.scan(cell, h0, jnp.transpose(x, (1, 0, 2)))   # (T, B, H)
    pooled = jnp.max(hs, axis=0)                                  # (B, H)
    h1 = jax.nn.relu(pooled @ params["w_fc1"].T + params["b_fc1"])
    h2 = jax.nn.relu(h1 @ params["w_fc2"].T + params["b_fc2"])
    out = h2 @ params["w_fc3"].T + params["b_fc3"]
    if softmax:
        out = jax.nn.softmax(out, axis=-1)
    return out


# --------------------------------- Main ---------------------------------------
if __name__ == "__main__":
    # Module defaults: input_size=3, label_size=3, hidden_layer=10.
    B, T, I, H, L = 2, 8, 3, 10, 3

    key = jax.random.PRNGKey(0)
    keys = jax.random.split(key, 12)
    scale = 0.3
    params = {
        "w_ih":  scale * jax.random.normal(keys[0], (3 * H, I), jnp.float32),
        "w_hh":  scale * jax.random.normal(keys[1], (3 * H, H), jnp.float32),
        "b_ih":  scale * jax.random.normal(keys[2], (3 * H,), jnp.float32),
        "b_hh":  scale * jax.random.normal(keys[3], (3 * H,), jnp.float32),
        "w_fc1": scale * jax.random.normal(keys[4], (2 * H, H), jnp.float32),
        "b_fc1": scale * jax.random.normal(keys[5], (2 * H,), jnp.float32),
        "w_fc2": scale * jax.random.normal(keys[6], (2 * H, 2 * H), jnp.float32),
        "b_fc2": scale * jax.random.normal(keys[7], (2 * H,), jnp.float32),
        "w_fc3": scale * jax.random.normal(keys[8], (L, 2 * H), jnp.float32),
        "b_fc3": scale * jax.random.normal(keys[9], (L,), jnp.float32),
    }
    x = jax.random.normal(keys[10], (B, T, I), jnp.float32)

    packed = pack_params(params)
    packed["slab"] = jax.block_until_ready(packed["slab"])

    # bf16 MXU operands on the GRU path (per the perf review) -> compare against the
    # pure-f32 reference with a correspondingly looser tolerance (~1e-2 level drift).
    out = jax.block_until_ready(simple_head_pose_forward(x, packed, softmax=False))
    ref = reference_forward(x, params, softmax=False)
    assert out.shape == (B, L)
    assert bool(jnp.all(jnp.isfinite(out)))
    assert jnp.allclose(out, ref, atol=5e-2, rtol=5e-2), (out, ref)

    out_sm = jax.block_until_ready(simple_head_pose_forward(x, packed, softmax=True))
    ref_sm = reference_forward(x, params, softmax=True)
    assert jnp.allclose(out_sm, ref_sm, atol=5e-2, rtol=5e-2), (out_sm, ref_sm)

    print("KERNEL_OK")
</pallas_src>

<mosaic_0001>
module attributes {stable_mosaic.version = 11 : i64} {
  func.func @gru_mlp_kernel(%arg0: memref<2x8x3xf32, #tpu.memory_space<vmem>>, %arg1: memref<96x384xf32, #tpu.memory_space<vmem>>, %arg2: memref<2x3xf32, #tpu.memory_space<vmem>>) attributes {dimension_semantics = [], scalar_prefetch = 0 : i64, scratch_operands = 0 : i64, tpu.core_type = #tpu.core_type<tc>} {
    %c0 = arith.constant 0 : index
    %c0_0 = arith.constant 0 : index
    %0 = vector.load %arg1[%c0, %c0_0] : memref<96x384xf32, #tpu.memory_space<vmem>>, vector<3x384xf32>
    %1 = arith.truncf %0 : vector<3x384xf32> to vector<3x384xbf16>
    %c8 = arith.constant 8 : index
    %c0_1 = arith.constant 0 : index
    %2 = vector.load %arg1[%c8, %c0_1] : memref<96x384xf32, #tpu.memory_space<vmem>>, vector<10x384xf32>
    %3 = arith.truncf %2 : vector<10x384xf32> to vector<10x384xbf16>
    %c24 = arith.constant 24 : index
    %c0_2 = arith.constant 0 : index
    %4 = vector.load %arg1[%c24, %c0_2] : memref<96x384xf32, #tpu.memory_space<vmem>>, vector<1x384xf32>
    %c25 = arith.constant 25 : index
    %c0_3 = arith.constant 0 : index
    %5 = vector.load %arg1[%c25, %c0_3] : memref<96x384xf32, #tpu.memory_space<vmem>>, vector<1x10xf32>
    %c26 = arith.constant 26 : index
    %c0_4 = arith.constant 0 : index
    %6 = vector.load %arg1[%c26, %c0_4] : memref<96x384xf32, #tpu.memory_space<vmem>>, vector<1x20xf32>
    %c27 = arith.constant 27 : index
    %c0_5 = arith.constant 0 : index
    %7 = vector.load %arg1[%c27, %c0_5] : memref<96x384xf32, #tpu.memory_space<vmem>>, vector<1x20xf32>
    %c28 = arith.constant 28 : index
    %c0_6 = arith.constant 0 : index
    %8 = vector.load %arg1[%c28, %c0_6] : memref<96x384xf32, #tpu.memory_space<vmem>>, vector<1x3xf32>
    %c32 = arith.constant 32 : index
    %c0_7 = arith.constant 0 : index
    %9 = vector.load %arg1[%c32, %c0_7] : memref<96x384xf32, #tpu.memory_space<vmem>>, vector<10x20xf32>
    %c48 = arith.constant 48 : index
    %c0_8 = arith.constant 0 : index
    %10 = vector.load %arg1[%c48, %c0_8] : memref<96x384xf32, #tpu.memory_space<vmem>>, vector<20x20xf32>
    %c72 = arith.constant 72 : index
    %c0_9 = arith.constant 0 : index
    %11 = vector.load %arg1[%c72, %c0_9] : memref<96x384xf32, #tpu.memory_space<vmem>>, vector<20x3xf32>
    %c0_10 = arith.constant 0 : index
    %c0_11 = arith.constant 0 : index
    %c0_12 = arith.constant 0 : index
    %12 = vector.load %arg0[%c0_10, %c0_11, %c0_12] : memref<2x8x3xf32, #tpu.memory_space<vmem>>, vector<1x8x3xf32>
    %13 = vector.shape_cast %12 : vector<1x8x3xf32> to vector<8x3xf32>
    %c1 = arith.constant 1 : index
    %c0_13 = arith.constant 0 : index
    %c0_14 = arith.constant 0 : index
    %14 = vector.load %arg0[%c1, %c0_13, %c0_14] : memref<2x8x3xf32, #tpu.memory_space<vmem>>, vector<1x8x3xf32>
    %15 = vector.shape_cast %14 : vector<1x8x3xf32> to vector<8x3xf32>
    %16 = tpu.concatenate %13, %15 in 0 : vector<8x3xf32>, vector<8x3xf32> -> vector<16x3xf32>
    %17 = arith.truncf %16 : vector<16x3xf32> to vector<16x3xbf16>
    %cst = arith.constant dense<0.000000e+00> : vector<16x384xf32>
    %18 = tpu.matmul %17, %1, %cst {dimension_numbers = #tpu.dot_dimension_numbers<[1], [0], [0], [1], [0, 0, 1, 1], [], []>} : vector<16x3xbf16>, vector<3x384xbf16>, vector<16x384xf32> -> vector<16x384xf32>
    %19 = vector.broadcast %4 : vector<1x384xf32> to vector<16x384xf32>
    %20 = arith.addf %18, %19 : vector<16x384xf32>
    %21 = vector.extract_strided_slice %20 {offsets = [0, 0], sizes = [1, 384], strides = [1, 1]} : vector<16x384xf32> to vector<1x384xf32>
    %22 = vector.extract_strided_slice %20 {offsets = [8, 0], sizes = [1, 384], strides = [1, 1]} : vector<16x384xf32> to vector<1x384xf32>
    %23 = tpu.concatenate %21, %22 in 0 : vector<1x384xf32>, vector<1x384xf32> -> vector<2x384xf32>
    %24 = vector.extract_strided_slice %23 {offsets = [0, 0], sizes = [2, 10], strides = [1, 1]} : vector<2x384xf32> to vector<2x10xf32>
    %25 = arith.negf %24 : vector<2x10xf32>
    %26 = math.exp %25 : vector<2x10xf32>
    %cst_15 = arith.constant 1.000000e+00 : f32
    %27 = vector.broadcast %cst_15 : f32 to vector<2x10xf32>
    %28 = arith.addf %27, %26 : vector<2x10xf32>
    %29 = arith.divf %27, %28 : vector<2x10xf32>
    %30 = vector.extract_strided_slice %23 {offsets = [0, 128], sizes = [2, 10], strides = [1, 1]} : vector<2x384xf32> to vector<2x10xf32>
    %31 = arith.negf %30 : vector<2x10xf32>
    %32 = math.exp %31 : vector<2x10xf32>
    %cst_16 = arith.constant 1.000000e+00 : f32
    %33 = vector.broadcast %cst_16 : f32 to vector<2x10xf32>
    %34 = arith.addf %33, %32 : vector<2x10xf32>
    %35 = arith.divf %33, %34 : vector<2x10xf32>
    %36 = vector.extract_strided_slice %23 {offsets = [0, 256], sizes = [2, 10], strides = [1, 1]} : vector<2x384xf32> to vector<2x10xf32>
    %37 = vector.broadcast %5 : vector<1x10xf32> to vector<2x10xf32>
    %38 = arith.mulf %29, %37 : vector<2x10xf32>
    %39 = arith.addf %36, %38 : vector<2x10xf32>
    %40 = math.tanh %39 : vector<2x10xf32>
    %cst_17 = arith.constant 1.000000e+00 : f32
    %41 = vector.broadcast %cst_17 : f32 to vector<2x10xf32>
    %42 = arith.subf %41, %35 : vector<2x10xf32>
    %43 = arith.mulf %42, %40 : vector<2x10xf32>
    %44 = arith.truncf %43 : vector<2x10xf32> to vector<2x10xbf16>
    %cst_18 = arith.constant dense<0.000000e+00> : vector<2x384xf32>
    %45 = tpu.matmul %44, %3, %cst_18 {dimension_numbers = #tpu.dot_dimension_numbers<[1], [0], [0], [1], [0, 0, 1, 1], [], []>} : vector<2x10xbf16>, vector<10x384xbf16>, vector<2x384xf32> -> vector<2x384xf32>
    %46 = vector.extract_strided_slice %20 {offsets = [1, 0], sizes = [1, 384], strides = [1, 1]} : vector<16x384xf32> to vector<1x384xf32>
    %47 = vector.extract_strided_slice %20 {offsets = [9, 0], sizes = [1, 384], strides = [1, 1]} : vector<16x384xf32> to vector<1x384xf32>
    %48 = tpu.concatenate %46, %47 in 0 : vector<1x384xf32>, vector<1x384xf32> -> vector<2x384xf32>
    %49 = vector.extract_strided_slice %48 {offsets = [0, 0], sizes = [2, 10], strides = [1, 1]} : vector<2x384xf32> to vector<2x10xf32>
    %50 = vector.extract_strided_slice %45 {offsets = [0, 0], sizes = [2, 10], strides = [1, 1]} : vector<2x384xf32> to vector<2x10xf32>
    %51 = arith.addf %49, %50 : vector<2x10xf32>
    %52 = arith.negf %51 : vector<2x10xf32>
    %53 = math.exp %52 : vector<2x10xf32>
    %cst_19 = arith.constant 1.000000e+00 : f32
    %54 = vector.broadcast %cst_19 : f32 to vector<2x10xf32>
    %55 = arith.addf %54, %53 : vector<2x10xf32>
    %56 = arith.divf %54, %55 : vector<2x10xf32>
    %57 = vector.extract_strided_slice %48 {offsets = [0, 128], sizes = [2, 10], strides = [1, 1]} : vector<2x384xf32> to vector<2x10xf32>
    %58 = vector.extract_strided_slice %45 {offsets = [0, 128], sizes = [2, 10], strides = [1, 1]} : vector<2x384xf32> to vector<2x10xf32>
    %59 = arith.addf %57, %58 : vector<2x10xf32>
    %60 = arith.negf %59 : vector<2x10xf32>
    %61 = math.exp %60 : vector<2x10xf32>
    %cst_20 = arith.constant 1.000000e+00 : f32
    %62 = vector.broadcast %cst_20 : f32 to vector<2x10xf32>
    %63 = arith.addf %62, %61 : vector<2x10xf32>
    %64 = arith.divf %62, %63 : vector<2x10xf32>
    %65 = vector.extract_strided_slice %48 {offsets = [0, 256], sizes = [2, 10], strides = [1, 1]} : vector<2x384xf32> to vector<2x10xf32>
    %66 = vector.extract_strided_slice %45 {offsets = [0, 256], sizes = [2, 10], strides = [1, 1]} : vector<2x384xf32> to vector<2x10xf32>
    %67 = vector.broadcast %5 : vector<1x10xf32> to vector<2x10xf32>
    %68 = arith.addf %66, %67 : vector<2x10xf32>
    %69 = arith.mulf %56, %68 : vector<2x10xf32>
    %70 = arith.addf %65, %69 : vector<2x10xf32>
    %71 = math.tanh %70 : vector<2x10xf32>
    %cst_21 = arith.constant 1.000000e+00 : f32
    %72 = vector.broadcast %cst_21 : f32 to vector<2x10xf32>
    %73 = arith.subf %72, %64 : vector<2x10xf32>
    %74 = arith.mulf %73, %71 : vector<2x10xf32>
    %75 = arith.mulf %64, %43 : vector<2x10xf32>
    %76 = arith.addf %74, %75 : vector<2x10xf32>
    %77 = arith.maximumf %43, %76 : vector<2x10xf32>
    %78 = arith.truncf %76 : vector<2x10xf32> to vector<2x10xbf16>
    %cst_22 = arith.constant dense<0.000000e+00> : vector<2x384xf32>
    %79 = tpu.matmul %78, %3, %cst_22 {dimension_numbers = #tpu.dot_dimension_numbers<[1], [0], [0], [1], [0, 0, 1, 1], [], []>} : vector<2x10xbf16>, vector<10x384xbf16>, vector<2x384xf32> -> vector<2x384xf32>
    %80 = vector.extract_strided_slice %20 {offsets = [2, 0], sizes = [1, 384], strides = [1, 1]} : vector<16x384xf32> to vector<1x384xf32>
    %81 = vector.extract_strided_slice %20 {offsets = [10, 0], sizes = [1, 384], strides = [1, 1]} : vector<16x384xf32> to vector<1x384xf32>
    %82 = tpu.concatenate %80, %81 in 0 : vector<1x384xf32>, vector<1x384xf32> -> vector<2x384xf32>
    %83 = vector.extract_strided_slice %82 {offsets = [0, 0], sizes = [2, 10], strides = [1, 1]} : vector<2x384xf32> to vector<2x10xf32>
    %84 = vector.extract_strided_slice %79 {offsets = [0, 0], sizes = [2, 10], strides = [1, 1]} : vector<2x384xf32> to vector<2x10xf32>
    %85 = arith.addf %83, %84 : vector<2x10xf32>
    %86 = arith.negf %85 : vector<2x10xf32>
    %87 = math.exp %86 : vector<2x10xf32>
    %cst_23 = arith.constant 1.000000e+00 : f32
    %88 = vector.broadcast %cst_23 : f32 to vector<2x10xf32>
    %89 = arith.addf %88, %87 : vector<2x10xf32>
    %90 = arith.divf %88, %89 : vector<2x10xf32>
    %91 = vector.extract_strided_slice %82 {offsets = [0, 128], sizes = [2, 10], strides = [1, 1]} : vector<2x384xf32> to vector<2x10xf32>
    %92 = vector.extract_strided_slice %79 {offsets = [0, 128], sizes = [2, 10], strides = [1, 1]} : vector<2x384xf32> to vector<2x10xf32>
    %93 = arith.addf %91, %92 : vector<2x10xf32>
    %94 = arith.negf %93 : vector<2x10xf32>
    %95 = math.exp %94 : vector<2x10xf32>
    %cst_24 = arith.constant 1.000000e+00 : f32
    %96 = vector.broadcast %cst_24 : f32 to vector<2x10xf32>
    %97 = arith.addf %96, %95 : vector<2x10xf32>
    %98 = arith.divf %96, %97 : vector<2x10xf32>
    %99 = vector.extract_strided_slice %82 {offsets = [0, 256], sizes = [2, 10], strides = [1, 1]} : vector<2x384xf32> to vector<2x10xf32>
    %100 = vector.extract_strided_slice %79 {offsets = [0, 256], sizes = [2, 10], strides = [1, 1]} : vector<2x384xf32> to vector<2x10xf32>
    %101 = vector.broadcast %5 : vector<1x10xf32> to vector<2x10xf32>
    %102 = arith.addf %100, %101 : vector<2x10xf32>
    %103 = arith.mulf %90, %102 : vector<2x10xf32>
    %104 = arith.addf %99, %103 : vector<2x10xf32>
    %105 = math.tanh %104 : vector<2x10xf32>
    %cst_25 = arith.constant 1.000000e+00 : f32
    %106 = vector.broadcast %cst_25 : f32 to vector<2x10xf32>
    %107 = arith.subf %106, %98 : vector<2x10xf32>
    %108 = arith.mulf %107, %105 : vector<2x10xf32>
    %109 = arith.mulf %98, %76 : vector<2x10xf32>
    %110 = arith.addf %108, %109 : vector<2x10xf32>
    %111 = arith.maximumf %77, %110 : vector<2x10xf32>
    %112 = arith.truncf %110 : vector<2x10xf32> to vector<2x10xbf16>
    %cst_26 = arith.constant dense<0.000000e+00> : vector<2x384xf32>
    %113 = tpu.matmul %112, %3, %cst_26 {dimension_numbers = #tpu.dot_dimension_numbers<[1], [0], [0], [1], [0, 0, 1, 1], [], []>} : vector<2x10xbf16>, vector<10x384xbf16>, vector<2x384xf32> -> vector<2x384xf32>
    %114 = vector.extract_strided_slice %20 {offsets = [3, 0], sizes = [1, 384], strides = [1, 1]} : vector<16x384xf32> to vector<1x384xf32>
    %115 = vector.extract_strided_slice %20 {offsets = [11, 0], sizes = [1, 384], strides = [1, 1]} : vector<16x384xf32> to vector<1x384xf32>
    %116 = tpu.concatenate %114, %115 in 0 : vector<1x384xf32>, vector<1x384xf32> -> vector<2x384xf32>
    %117 = vector.extract_strided_slice %116 {offsets = [0, 0], sizes = [2, 10], strides = [1, 1]} : vector<2x384xf32> to vector<2x10xf32>
    %118 = vector.extract_strided_slice %113 {offsets = [0, 0], sizes = [2, 10], strides = [1, 1]} : vector<2x384xf32> to vector<2x10xf32>
    %119 = arith.addf %117, %118 : vector<2x10xf32>
    %120 = arith.negf %119 : vector<2x10xf32>
    %121 = math.exp %120 : vector<2x10xf32>
    %cst_27 = arith.constant 1.000000e+00 : f32
    %122 = vector.broadcast %cst_27 : f32 to vector<2x10xf32>
    %123 = arith.addf %122, %121 : vector<2x10xf32>
    %124 = arith.divf %122, %123 : vector<2x10xf32>
    %125 = vector.extract_strided_slice %116 {offsets = [0, 128], sizes = [2, 10], strides = [1, 1]} : vector<2x384xf32> to vector<2x10xf32>
    %126 = vector.extract_strided_slice %113 {offsets = [0, 128], sizes = [2, 10], strides = [1, 1]} : vector<2x384xf32> to vector<2x10xf32>
    %127 = arith.addf %125, %126 : vector<2x10xf32>
    %128 = arith.negf %127 : vector<2x10xf32>
    %129 = math.exp %128 : vector<2x10xf32>
    %cst_28 = arith.constant 1.000000e+00 : f32
    %130 = vector.broadcast %cst_28 : f32 to vector<2x10xf32>
    %131 = arith.addf %130, %129 : vector<2x10xf32>
    %132 = arith.divf %130, %131 : vector<2x10xf32>
    %133 = vector.extract_strided_slice %116 {offsets = [0, 256], sizes = [2, 10], strides = [1, 1]} : vector<2x384xf32> to vector<2x10xf32>
    %134 = vector.extract_strided_slice %113 {offsets = [0, 256], sizes = [2, 10], strides = [1, 1]} : vector<2x384xf32> to vector<2x10xf32>
    %135 = vector.broadcast %5 : vector<1x10xf32> to vector<2x10xf32>
    %136 = arith.addf %134, %135 : vector<2x10xf32>
    %137 = arith.mulf %124, %136 : vector<2x10xf32>
    %138 = arith.addf %133, %137 : vector<2x10xf32>
    %139 = math.tanh %138 : vector<2x10xf32>
    %cst_29 = arith.constant 1.000000e+00 : f32
    %140 = vector.broadcast %cst_29 : f32 to vector<2x10xf32>
    %141 = arith.subf %140, %132 : vector<2x10xf32>
    %142 = arith.mulf %141, %139 : vector<2x10xf32>
    %143 = arith.mulf %132, %110 : vector<2x10xf32>
    %144 = arith.addf %142, %143 : vector<2x10xf32>
    %145 = arith.maximumf %111, %144 : vector<2x10xf32>
    %146 = arith.truncf %144 : vector<2x10xf32> to vector<2x10xbf16>
    %cst_30 = arith.constant dense<0.000000e+00> : vector<2x384xf32>
    %147 = tpu.matmul %146, %3, %cst_30 {dimension_numbers = #tpu.dot_dimension_numbers<[1], [0], [0], [1], [0, 0, 1, 1], [], []>} : vector<2x10xbf16>, vector<10x384xbf16>, vector<2x384xf32> -> vector<2x384xf32>
    %148 = vector.extract_strided_slice %20 {offsets = [4, 0], sizes = [1, 384], strides = [1, 1]} : vector<16x384xf32> to vector<1x384xf32>
    %149 = vector.extract_strided_slice %20 {offsets = [12, 0], sizes = [1, 384], strides = [1, 1]} : vector<16x384xf32> to vector<1x384xf32>
    %150 = tpu.concatenate %148, %149 in 0 : vector<1x384xf32>, vector<1x384xf32> -> vector<2x384xf32>
    %151 = vector.extract_strided_slice %150 {offsets = [0, 0], sizes = [2, 10], strides = [1, 1]} : vector<2x384xf32> to vector<2x10xf32>
    %152 = vector.extract_strided_slice %147 {offsets = [0, 0], sizes = [2, 10], strides = [1, 1]} : vector<2x384xf32> to vector<2x10xf32>
    %153 = arith.addf %151, %152 : vector<2x10xf32>
    %154 = arith.negf %153 : vector<2x10xf32>
    %155 = math.exp %154 : vector<2x10xf32>
    %cst_31 = arith.constant 1.000000e+00 : f32
    %156 = vector.broadcast %cst_31 : f32 to vector<2x10xf32>
    %157 = arith.addf %156, %155 : vector<2x10xf32>
    %158 = arith.divf %156, %157 : vector<2x10xf32>
    %159 = vector.extract_strided_slice %150 {offsets = [0, 128], sizes = [2, 10], strides = [1, 1]} : vector<2x384xf32> to vector<2x10xf32>
    %160 = vector.extract_strided_slice %147 {offsets = [0, 128], sizes = [2, 10], strides = [1, 1]} : vector<2x384xf32> to vector<2x10xf32>
    %161 = arith.addf %159, %160 : vector<2x10xf32>
    %162 = arith.negf %161 : vector<2x10xf32>
    %163 = math.exp %162 : vector<2x10xf32>
    %cst_32 = arith.constant 1.000000e+00 : f32
    %164 = vector.broadcast %cst_32 : f32 to vector<2x10xf32>
    %165 = arith.addf %164, %163 : vector<2x10xf32>
    %166 = arith.divf %164, %165 : vector<2x10xf32>
    %167 = vector.extract_strided_slice %150 {offsets = [0, 256], sizes = [2, 10], strides = [1, 1]} : vector<2x384xf32> to vector<2x10xf32>
    %168 = vector.extract_strided_slice %147 {offsets = [0, 256], sizes = [2, 10], strides = [1, 1]} : vector<2x384xf32> to vector<2x10xf32>
    %169 = vector.broadcast %5 : vector<1x10xf32> to vector<2x10xf32>
    %170 = arith.addf %168, %169 : vector<2x10xf32>
    %171 = arith.mulf %158, %170 : vector<2x10xf32>
    %172 = arith.addf %167, %171 : vector<2x10xf32>
    %173 = math.tanh %172 : vector<2x10xf32>
    %cst_33 = arith.constant 1.000000e+00 : f32
    %174 = vector.broadcast %cst_33 : f32 to vector<2x10xf32>
    %175 = arith.subf %174, %166 : vector<2x10xf32>
    %176 = arith.mulf %175, %173 : vector<2x10xf32>
    %177 = arith.mulf %166, %144 : vector<2x10xf32>
    %178 = arith.addf %176, %177 : vector<2x10xf32>
    %179 = arith.maximumf %145, %178 : vector<2x10xf32>
    %180 = arith.truncf %178 : vector<2x10xf32> to vector<2x10xbf16>
    %cst_34 = arith.constant dense<0.000000e+00> : vector<2x384xf32>
    %181 = tpu.matmul %180, %3, %cst_34 {dimension_numbers = #tpu.dot_dimension_numbers<[1], [0], [0], [1], [0, 0, 1, 1], [], []>} : vector<2x10xbf16>, vector<10x384xbf16>, vector<2x384xf32> -> vector<2x384xf32>
    %182 = vector.extract_strided_slice %20 {offsets = [5, 0], sizes = [1, 384], strides = [1, 1]} : vector<16x384xf32> to vector<1x384xf32>
    %183 = vector.extract_strided_slice %20 {offsets = [13, 0], sizes = [1, 384], strides = [1, 1]} : vector<16x384xf32> to vector<1x384xf32>
    %184 = tpu.concatenate %182, %183 in 0 : vector<1x384xf32>, vector<1x384xf32> -> vector<2x384xf32>
    %185 = vector.extract_strided_slice %184 {offsets = [0, 0], sizes = [2, 10], strides = [1, 1]} : vector<2x384xf32> to vector<2x10xf32>
    %186 = vector.extract_strided_slice %181 {offsets = [0, 0], sizes = [2, 10], strides = [1, 1]} : vector<2x384xf32> to vector<2x10xf32>
    %187 = arith.addf %185, %186 : vector<2x10xf32>
    %188 = arith.negf %187 : vector<2x10xf32>
    %189 = math.exp %188 : vector<2x10xf32>
    %cst_35 = arith.constant 1.000000e+00 : f32
    %190 = vector.broadcast %cst_35 : f32 to vector<2x10xf32>
    %191 = arith.addf %190, %189 : vector<2x10xf32>
    %192 = arith.divf %190, %191 : vector<2x10xf32>
    %193 = vector.extract_strided_slice %184 {offsets = [0, 128], sizes = [2, 10], strides = [1, 1]} : vector<2x384xf32> to vector<2x10xf32>
    %194 = vector.extract_strided_slice %181 {offsets = [0, 128], sizes = [2, 10], strides = [1, 1]} : vector<2x384xf32> to vector<2x10xf32>
    %195 = arith.addf %193, %194 : vector<2x10xf32>
    %196 = arith.negf %195 : vector<2x10xf32>
    %197 = math.exp %196 : vector<2x10xf32>
    %cst_36 = arith.constant 1.000000e+00 : f32
    %198 = vector.broadcast %cst_36 : f32 to vector<2x10xf32>
    %199 = arith.addf %198, %197 : vector<2x10xf32>
    %200 = arith.divf %198, %199 : vector<2x10xf32>
    %201 = vector.extract_strided_slice %184 {offsets = [0, 256], sizes = [2, 10], strides = [1, 1]} : vector<2x384xf32> to vector<2x10xf32>
    %202 = vector.extract_strided_slice %181 {offsets = [0, 256], sizes = [2, 10], strides = [1, 1]} : vector<2x384xf32> to vector<2x10xf32>
    %203 = vector.broadcast %5 : vector<1x10xf32> to vector<2x10xf32>
    %204 = arith.addf %202, %203 : vector<2x10xf32>
    %205 = arith.mulf %192, %204 : vector<2x10xf32>
    %206 = arith.addf %201, %205 : vector<2x10xf32>
    %207 = math.tanh %206 : vector<2x10xf32>
    %cst_37 = arith.constant 1.000000e+00 : f32
    %208 = vector.broadcast %cst_37 : f32 to vector<2x10xf32>
    %209 = arith.subf %208, %200 : vector<2x10xf32>
    %210 = arith.mulf %209, %207 : vector<2x10xf32>
    %211 = arith.mulf %200, %178 : vector<2x10xf32>
    %212 = arith.addf %210, %211 : vector<2x10xf32>
    %213 = arith.maximumf %179, %212 : vector<2x10xf32>
    %214 = arith.truncf %212 : vector<2x10xf32> to vector<2x10xbf16>
    %cst_38 = arith.constant dense<0.000000e+00> : vector<2x384xf32>
    %215 = tpu.matmul %214, %3, %cst_38 {dimension_numbers = #tpu.dot_dimension_numbers<[1], [0], [0], [1], [0, 0, 1, 1], [], []>} : vector<2x10xbf16>, vector<10x384xbf16>, vector<2x384xf32> -> vector<2x384xf32>
    %216 = vector.extract_strided_slice %20 {offsets = [6, 0], sizes = [1, 384], strides = [1, 1]} : vector<16x384xf32> to vector<1x384xf32>
    %217 = vector.extract_strided_slice %20 {offsets = [14, 0], sizes = [1, 384], strides = [1, 1]} : vector<16x384xf32> to vector<1x384xf32>
    %218 = tpu.concatenate %216, %217 in 0 : vector<1x384xf32>, vector<1x384xf32> -> vector<2x384xf32>
    %219 = vector.extract_strided_slice %218 {offsets = [0, 0], sizes = [2, 10], strides = [1, 1]} : vector<2x384xf32> to vector<2x10xf32>
    %220 = vector.extract_strided_slice %215 {offsets = [0, 0], sizes = [2, 10], strides = [1, 1]} : vector<2x384xf32> to vector<2x10xf32>
    %221 = arith.addf %219, %220 : vector<2x10xf32>
    %222 = arith.negf %221 : vector<2x10xf32>
    %223 = math.exp %222 : vector<2x10xf32>
    %cst_39 = arith.constant 1.000000e+00 : f32
    %224 = vector.broadcast %cst_39 : f32 to vector<2x10xf32>
    %225 = arith.addf %224, %223 : vector<2x10xf32>
    %226 = arith.divf %224, %225 : vector<2x10xf32>
    %227 = vector.extract_strided_slice %218 {offsets = [0, 128], sizes = [2, 10], strides = [1, 1]} : vector<2x384xf32> to vector<2x10xf32>
    %228 = vector.extract_strided_slice %215 {offsets = [0, 128], sizes = [2, 10], strides = [1, 1]} : vector<2x384xf32> to vector<2x10xf32>
    %229 = arith.addf %227, %228 : vector<2x10xf32>
    %230 = arith.negf %229 : vector<2x10xf32>
    %231 = math.exp %230 : vector<2x10xf32>
    %cst_40 = arith.constant 1.000000e+00 : f32
    %232 = vector.broadcast %cst_40 : f32 to vector<2x10xf32>
    %233 = arith.addf %232, %231 : vector<2x10xf32>
    %234 = arith.divf %232, %233 : vector<2x10xf32>
    %235 = vector.extract_strided_slice %218 {offsets = [0, 256], sizes = [2, 10], strides = [1, 1]} : vector<2x384xf32> to vector<2x10xf32>
    %236 = vector.extract_strided_slice %215 {offsets = [0, 256], sizes = [2, 10], strides = [1, 1]} : vector<2x384xf32> to vector<2x10xf32>
    %237 = vector.broadcast %5 : vector<1x10xf32> to vector<2x10xf32>
    %238 = arith.addf %236, %237 : vector<2x10xf32>
    %239 = arith.mulf %226, %238 : vector<2x10xf32>
    %240 = arith.addf %235, %239 : vector<2x10xf32>
    %241 = math.tanh %240 : vector<2x10xf32>
    %cst_41 = arith.constant 1.000000e+00 : f32
    %242 = vector.broadcast %cst_41 : f32 to vector<2x10xf32>
    %243 = arith.subf %242, %234 : vector<2x10xf32>
    %244 = arith.mulf %243, %241 : vector<2x10xf32>
    %245 = arith.mulf %234, %212 : vector<2x10xf32>
    %246 = arith.addf %244, %245 : vector<2x10xf32>
    %247 = arith.maximumf %213, %246 : vector<2x10xf32>
    %248 = arith.truncf %246 : vector<2x10xf32> to vector<2x10xbf16>
    %cst_42 = arith.constant dense<0.000000e+00> : vector<2x384xf32>
    %249 = tpu.matmul %248, %3, %cst_42 {dimension_numbers = #tpu.dot_dimension_numbers<[1], [0], [0], [1], [0, 0, 1, 1], [], []>} : vector<2x10xbf16>, vector<10x384xbf16>, vector<2x384xf32> -> vector<2x384xf32>
    %250 = vector.extract_strided_slice %20 {offsets = [7, 0], sizes = [1, 384], strides = [1, 1]} : vector<16x384xf32> to vector<1x384xf32>
    %251 = vector.extract_strided_slice %20 {offsets = [15, 0], sizes = [1, 384], strides = [1, 1]} : vector<16x384xf32> to vector<1x384xf32>
    %252 = tpu.concatenate %250, %251 in 0 : vector<1x384xf32>, vector<1x384xf32> -> vector<2x384xf32>
    %253 = vector.extract_strided_slice %252 {offsets = [0, 0], sizes = [2, 10], strides = [1, 1]} : vector<2x384xf32> to vector<2x10xf32>
    %254 = vector.extract_strided_slice %249 {offsets = [0, 0], sizes = [2, 10], strides = [1, 1]} : vector<2x384xf32> to vector<2x10xf32>
    %255 = arith.addf %253, %254 : vector<2x10xf32>
    %256 = arith.negf %255 : vector<2x10xf32>
    %257 = math.exp %256 : vector<2x10xf32>
    %cst_43 = arith.constant 1.000000e+00 : f32
    %258 = vector.broadcast %cst_43 : f32 to vector<2x10xf32>
    %259 = arith.addf %258, %257 : vector<2x10xf32>
    %260 = arith.divf %258, %259 : vector<2x10xf32>
    %261 = vector.extract_strided_slice %252 {offsets = [0, 128], sizes = [2, 10], strides = [1, 1]} : vector<2x384xf32> to vector<2x10xf32>
    %262 = vector.extract_strided_slice %249 {offsets = [0, 128], sizes = [2, 10], strides = [1, 1]} : vector<2x384xf32> to vector<2x10xf32>
    %263 = arith.addf %261, %262 : vector<2x10xf32>
    %264 = arith.negf %263 : vector<2x10xf32>
    %265 = math.exp %264 : vector<2x10xf32>
    %cst_44 = arith.constant 1.000000e+00 : f32
    %266 = vector.broadcast %cst_44 : f32 to vector<2x10xf32>
    %267 = arith.addf %266, %265 : vector<2x10xf32>
    %268 = arith.divf %266, %267 : vector<2x10xf32>
    %269 = vector.extract_strided_slice %252 {offsets = [0, 256], sizes = [2, 10], strides = [1, 1]} : vector<2x384xf32> to vector<2x10xf32>
    %270 = vector.extract_strided_slice %249 {offsets = [0, 256], sizes = [2, 10], strides = [1, 1]} : vector<2x384xf32> to vector<2x10xf32>
    %271 = vector.broadcast %5 : vector<1x10xf32> to vector<2x10xf32>
    %272 = arith.addf %270, %271 : vector<2x10xf32>
    %273 = arith.mulf %260, %272 : vector<2x10xf32>
    %274 = arith.addf %269, %273 : vector<2x10xf32>
    %275 = math.tanh %274 : vector<2x10xf32>
    %cst_45 = arith.constant 1.000000e+00 : f32
    %276 = vector.broadcast %cst_45 : f32 to vector<2x10xf32>
    %277 = arith.subf %276, %268 : vector<2x10xf32>
    %278 = arith.mulf %277, %275 : vector<2x10xf32>
    %279 = arith.mulf %268, %246 : vector<2x10xf32>
    %280 = arith.addf %278, %279 : vector<2x10xf32>
    %281 = arith.maximumf %247, %280 : vector<2x10xf32>
    %cst_46 = arith.constant dense<0.000000e+00> : vector<2x20xf32>
    %282 = tpu.matmul %281, %9, %cst_46 {dimension_numbers = #tpu.dot_dimension_numbers<[1], [0], [0], [1], [0, 0, 1, 1], [], []>} : vector<2x10xf32>, vector<10x20xf32>, vector<2x20xf32> -> vector<2x20xf32>
    %283 = vector.broadcast %6 : vector<1x20xf32> to vector<2x20xf32>
    %284 = arith.addf %282, %283 : vector<2x20xf32>
    %cst_47 = arith.constant 0.000000e+00 : f32
    %285 = vector.broadcast %cst_47 : f32 to vector<2x20xf32>
    %286 = arith.maximumf %284, %285 : vector<2x20xf32>
    %cst_48 = arith.constant dense<0.000000e+00> : vector<2x20xf32>
    %287 = tpu.matmul %286, %10, %cst_48 {dimension_numbers = #tpu.dot_dimension_numbers<[1], [0], [0], [1], [0, 0, 1, 1], [], []>} : vector<2x20xf32>, vector<20x20xf32>, vector<2x20xf32> -> vector<2x20xf32>
    %288 = vector.broadcast %7 : vector<1x20xf32> to vector<2x20xf32>
    %289 = arith.addf %287, %288 : vector<2x20xf32>
    %cst_49 = arith.constant 0.000000e+00 : f32
    %290 = vector.broadcast %cst_49 : f32 to vector<2x20xf32>
    %291 = arith.maximumf %289, %290 : vector<2x20xf32>
    %cst_50 = arith.constant dense<0.000000e+00> : vector<2x3xf32>
    %292 = tpu.matmul %291, %11, %cst_50 {dimension_numbers = #tpu.dot_dimension_numbers<[1], [0], [0], [1], [0, 0, 1, 1], [], []>} : vector<2x20xf32>, vector<20x3xf32>, vector<2x3xf32> -> vector<2x3xf32>
    %293 = vector.broadcast %8 : vector<1x3xf32> to vector<2x3xf32>
    %294 = arith.addf %292, %293 : vector<2x3xf32>
    %c0_51 = arith.constant 0 : index
    %c0_52 = arith.constant 0 : index
    %295 = vector.load %arg2[%c0_51, %c0_52] : memref<2x3xf32, #tpu.memory_space<vmem>>, vector<2x3xf32>
    tpu.vector_store %arg2[%c0_51, %c0_52], %294 {strides = array<i32>} : memref<2x3xf32, #tpu.memory_space<vmem>>, vector<2x3xf32>,
    return
  }
}

</mosaic_0001>

<llo_original>
// kernel: _forward.1
$region0: #{_forward.1}
  #allocation0 [shape = 'u32[]', space=smem, size = 0x4, offset = 0x4, fixed_abs, tag = 'smem constant byte address 0x4 - core index']
  #allocation1 [shape = 'u32[72,128]{1,0:T(1,128)}', space=vmem, size = 0x9000, scoped, tag = 'internal scratch']
  %s0 = inlined_call_operand.vmem [shape: f32[2,8,3], index: 0, kind: input, shape index: {}]
  %s1 = inlined_call_operand.hbm [shape: f32[96,384], index: 1, kind: input, shape index: {}]
  %s2 = inlined_call_operand.hbm [shape: f32[2,3], index: 2, kind: output, shape index: {}]
  %s3 = sld [smem:[#allocation0]]
  $region22: #{_forward.1} parent=0
    _
  %s5 = ssub.s32 1, %s3
  %s6 = scalar_select 0, %s5, %s3
  $region1: #{_forward.1} parent=0
    #allocation2 [shape = 'u8[147456]{0}', space=vmem, size = 0x24000, scoped, tag = 'input window, operand 1, single buffered']
    #allocation3 [shape = 's32[1]{0}', space=sflag, size = 0x4, scoped, tag = 'scoped memory for _forward.1']
    #allocation4 [shape = 's32[1]{0}', space=sflag, size = 0x4, scoped, tag = 'scoped memory for _forward.1']
    #allocation5 [shape = 'u8[1024]{0}', space=vmem, size = 0x400, scoped, tag = 'output window, operand 0, single buffered']
    %7 = vsyncpa [#allocation3], 0
    %8 = vsyncpa [#allocation4], 0
    // Predicated region
    $region2: #{_forward.1} parent=1 // pred_check
      _
    $region3: #{_forward.1} parent=1 // pred_check_branch
      %10 = sbr.rel (0) target = $region5
    $region4: #{_forward.1} parent=1 // pred_region
      _
    $region5: #{_forward.1} parent=1 // pred_fallthru
      _
    // Predicated region
    $region6: #{_forward.1} parent=1 // pred_check
      _
    $region7: #{_forward.1} parent=1 // pred_check_branch
      %12 = sbr.rel (0) target = $region9
    $region8: #{_forward.1} parent=1 // pred_region
      %14 = vsyncadd [#allocation3], 0
      %s15 = sshll.u32 %s1, 4
      %s16 = int_to_ptr.hbm [resolvable:$true] %s15
      %s17 = sshll.u32 [#allocation2], 4
      %s18 = int_to_ptr.vmem [resolvable:$true] %s17
      %23 = dma.hbm_to_vmem [thread:$0]  %s16, 4608, %s18, [#allocation3], 384, 384, 24
    $region9: #{_forward.1} parent=1 // pred_fallthru
      _
    // Predicated region
    $region10: #{_forward.1} parent=1 // pred_check
      _
    $region11: #{_forward.1} parent=1 // pred_check_branch
      %25 = sbr.rel (0) target = $region13
    $region12: #{_forward.1} parent=1 // pred_region
      %27 = dma.done [#allocation3], 4608
    $region13: #{_forward.1} parent=1 // pred_fallthru
      _
    %v29 = vld [vmem:[#allocation2] sm:$0x7]
    %v30 = vld [vmem:[#allocation2 + $0x8] sm:$0x7]
    %v31 = vld [vmem:[#allocation2 + $0x10] sm:$0x7]
    %v32 = vpack.c.bf16 %v29, %v29
    %v33 = vpack.c.bf16 %v30, %v30
    %v34 = vpack.c.bf16 %v31, %v31
    %v35 = vld [vmem:[#allocation2 + $0x18] sm:$0xff]
    %v36 = vld [vmem:[#allocation2 + $0x20] sm:$0xff]
    %v37 = vld [vmem:[#allocation2 + $0x28] sm:$0xff]
    %v38 = vld [vmem:[#allocation2 + $0x30] sm:$0x3]
    %v39 = vld [vmem:[#allocation2 + $0x38] sm:$0x3]
    %v40 = vld [vmem:[#allocation2 + $0x40] sm:$0x3]
    %v41 = vpack.c.bf16 %v38, %v35
    %v42 = vpack.c.bf16 %v39, %v36
    %v43 = vpack.c.bf16 %v40, %v37
    %s44 = scalar_lea.vmem [#allocation2], 72
    %v45 = vld [vmem:[%s44] ss:$8 sm:$0x7]
    %v46 = vld [vmem:[#allocation2 + $0x49] ss:$0 sm:$0xff]
    %v47 = vld [vmem:[#allocation2 + $0x4a] ss:$0 sm:$0xff]
    %v48 = vld [vmem:[#allocation2 + $0x4b] ss:$0 sm:$0xff]
    %v49 = vld [vmem:[#allocation2 + $0x4c] ss:$0 sm:$0xff]
    %v50 = vld [vmem:[#allocation2 + $0x60] sm:$0xff]
    %v51 = vld [vmem:[#allocation2 + $0x78] sm:$0x3]
    %v52 = vld [vmem:[#allocation2 + $0x90] sm:$0xff]
    %v53 = vld [vmem:[#allocation2 + $0xa8] sm:$0xff]
    %v54 = vld [vmem:[#allocation2 + $0xc0] sm:$0xf]
    %v55 = vld [vmem:[#allocation2 + $0xd8] sm:$0xff]
    %v56 = vld [vmem:[#allocation2 + $0xf0] sm:$0xff]
    %v57 = vld [vmem:[#allocation2 + $0x108] sm:$0xf]
    %v58 = vld [vmem:[%s0] sm:$0xff]
    %s59 = scalar_lea.vmem %s0, 8
    %v60 = vld [vmem:[%s59] sm:$0xff]
    %v61 = vpack.c.bf16 %v60, %v58
    %v63 = vperm.slane %v45, 0
    %v64 = vperm.slane %v45, 1
    %v65 = vperm.slane %v45, 2
    %vm69 = vcmask 23552
    %v71 = vsel %vm69, %v61, 0
    %vm73 = vcmask 1040384
    %vm74 = vcmask 1041408
    %v75 = vsel %vm73, 4294967295, 65535
    %v76 = vsel %vm74, %v75, 0
    %v78 = vand.u32 %v32, %v76
    %v81 = vand.u32 %v33, %v76
    %v84 = vand.u32 %v34, %v76
    %86 = vmatpush.bf16.msra.mxu0 0
    %87 = vmatpush.bf16.msra.mxu0 0
    %88 = vmatpush.bf16.msra.mxu0 0
    %89 = vmatpush.bf16.msra.mxu0 0
    %90 = vmatpush.bf16.msra.mxu0 0
    %91 = vmatpush.bf16.msra.mxu0 0
    %92 = vmatpush.bf16.msra.mxu0 0
    %93 = vmatpush.bf16.msra.mxu0 %v78
    %94 = vmatmul.bf16.gmra.mxu0 %v71
    %v95 = vpop.f32.mrf.mxu0
    %v96 = vadd.f32 %v63, %v95
    %v97 = vpop.f32.mrf.mxu0
    %v98 = vadd.f32 %v63, %v97
    %99 = vdwg.mxu0
    %100 = vmatpush.bf16.msra.mxu0 0
    %101 = vmatpush.bf16.msra.mxu0 0
    %102 = vmatpush.bf16.msra.mxu0 0
    %103 = vmatpush.bf16.msra.mxu0 0
    %104 = vmatpush.bf16.msra.mxu0 0
    %105 = vmatpush.bf16.msra.mxu0 0
    %106 = vmatpush.bf16.msra.mxu0 0
    %107 = vmatpush.bf16.msra.mxu0 %v81
    %108 = vmatmul.bf16.gmra.mxu0 %v71
    %v109 = vpop.f32.mrf.mxu0
    %v110 = vadd.f32 %v64, %v109
    %v111 = vpop.f32.mrf.mxu0
    %v112 = vadd.f32 %v64, %v111
    %113 = vdwg.mxu0
    %114 = vmatpush.bf16.msra.mxu0 0
    %115 = vmatpush.bf16.msra.mxu0 0
    %116 = vmatpush.bf16.msra.mxu0 0
    %117 = vmatpush.bf16.msra.mxu0 0
    %118 = vmatpush.bf16.msra.mxu0 0
    %119 = vmatpush.bf16.msra.mxu0 0
    %120 = vmatpush.bf16.msra.mxu0 0
    %121 = vmatpush.bf16.msra.mxu0 %v84
    %122 = vmatmul.bf16.gmra.mxu0 %v71
    %v123 = vpop.f32.mrf.mxu0
    %v124 = vadd.f32 %v65, %v123
    %v125 = vpop.f32.mrf.mxu0
    %v126 = vadd.f32 %v65, %v125
    %127 = vdwg.mxu0
    %v131 = vrot.slane %v98, 7
    %v132 = vrot.slane %v112, 7
    %v133 = vrot.slane %v126, 7
    %v137 = vsel %vm73, %v96, %v131
    %v138 = vsel %vm73, %v110, %v132
    %v139 = vsel %vm73, %v124, %v133
    %v140 = vxor.u32 %v137, 2147483648
    %v141 = vmul.f32 %v140, 1.442695
    %v142 = vpow.pop %v141
    %v143 = vadd.f32 %v142, 1.0
    %v144 = vrcp.pop %v143
    %v145 = vmul.f32 %v143, %v144
    %v146 = vsub.f32 1.0, %v145
    %v147 = vmul.f32 %v144, %v146
    %v148 = vadd.f32 %v144, %v147
    %vm149 = vweird.f32 %v143
    %vm150 = vweird.f32 %v144
    %vm151 = vmor %vm149, %vm150
    %v152 = vsel %vm151, %v144, %v148
    %v153 = vand.u32 2147483647, %v143
    %vm154 = vcmp.eq.f32.partialorder %v153, 8.507059e+37
    %v155 = vand.u32 %v143, 2147483648
    %v156 = vor.u32 1.1754944e-38, %v155
    %v157 = vsel %vm154, %v156, %v152
    %v158 = vmul.f32 1.0, %v157
    %v159 = vxor.u32 %v138, 2147483648
    %v160 = vmul.f32 %v159, 1.442695
    %v161 = vpow.pop %v160
    %v162 = vadd.f32 %v161, 1.0
    %v163 = vrcp.pop %v162
    %v164 = vmul.f32 %v162, %v163
    %v165 = vsub.f32 1.0, %v164
    %v166 = vmul.f32 %v163, %v165
    %v167 = vadd.f32 %v163, %v166
    %vm168 = vweird.f32 %v162
    %vm169 = vweird.f32 %v163
    %vm170 = vmor %vm168, %vm169
    %v171 = vsel %vm170, %v163, %v167
    %v172 = vand.u32 2147483647, %v162
    %vm173 = vcmp.eq.f32.partialorder %v172, 8.507059e+37
    %v174 = vand.u32 %v162, 2147483648
    %v175 = vor.u32 1.1754944e-38, %v174
    %v176 = vsel %vm173, %v175, %v171
    %v177 = vmul.f32 1.0, %v176
    %v178 = vmul.f32 %v158, %v46
    %v179 = vadd.f32 %v139, %v178
    %v180 = vtanh.pop %v179
    %v181 = vsub.f32 1.0, %v177
    %v182 = vmul.f32 %v181, %v180
    %v183 = vpack.c.bf16 %v182, %v182
    %vm184 = vcmask 80896
    %v186 = vsel %vm184, %v183, 0
    %vm188 = vcmask 1044480
    %v190 = vsel %vm188, %v41, 0
    %v193 = vsel %vm188, %v42, 0
    %v196 = vsel %vm188, %v43, 0
    %198 = vmatpush.bf16.msra.mxu0 0
    %199 = vmatpush.bf16.msra.mxu0 0
    %200 = vmatpush.bf16.msra.mxu0 0
    %201 = vmatpush.bf16.msra.mxu0 0
    %202 = vmatpush.bf16.msra.mxu0 0
    %203 = vmatpush.bf16.msra.mxu0 0
    %204 = vmatpush.bf16.msra.mxu0 0
    %205 = vmatpush.bf16.msra.mxu0 %v190
    %206 = vmatmul.bf16.gmra.mxu0 %v186
    %v207 = vpop.f32.mrf.mxu0
    %v208 = vadd.f32 0.0, %v207
    %v209 = vpop.f32.mrf.mxu0
    %210 = vdwg.mxu0
    %211 = vmatpush.bf16.msra.mxu0 0
    %212 = vmatpush.bf16.msra.mxu0 0
    %213 = vmatpush.bf16.msra.mxu0 0
    %214 = vmatpush.bf16.msra.mxu0 0
    %215 = vmatpush.bf16.msra.mxu0 0
    %216 = vmatpush.bf16.msra.mxu0 0
    %217 = vmatpush.bf16.msra.mxu0 0
    %218 = vmatpush.bf16.msra.mxu0 %v193
    %219 = vmatmul.bf16.gmra.mxu0 %v186
    %v220 = vpop.f32.mrf.mxu0
    %v221 = vadd.f32 0.0, %v220
    %v222 = vpop.f32.mrf.mxu0
    %223 = vdwg.mxu0
    %224 = vmatpush.bf16.msra.mxu0 0
    %225 = vmatpush.bf16.msra.mxu0 0
    %226 = vmatpush.bf16.msra.mxu0 0
    %227 = vmatpush.bf16.msra.mxu0 0
    %228 = vmatpush.bf16.msra.mxu0 0
    %229 = vmatpush.bf16.msra.mxu0 0
    %230 = vmatpush.bf16.msra.mxu0 0
    %231 = vmatpush.bf16.msra.mxu0 %v196
    %232 = vmatmul.bf16.gmra.mxu0 %v186
    %v233 = vpop.f32.mrf.mxu0
    %v234 = vadd.f32 0.0, %v233
    %v235 = vpop.f32.mrf.mxu0
    %236 = vdwg.mxu0
    %v240 = vrot.slane %v96, 1
    %v241 = vrot.slane %v110, 1
    %v242 = vrot.slane %v124, 1
    %v246 = vsel %vm73, %v240, %v98
    %v247 = vsel %vm73, %v241, %v112
    %v248 = vsel %vm73, %v242, %v126
    %v249 = vadd.f32 %v246, %v208
    %v250 = vxor.u32 %v249, 2147483648
    %v251 = vmul.f32 %v250, 1.442695
    %v252 = vpow.pop %v251
    %v253 = vadd.f32 %v252, 1.0
    %v254 = vrcp.pop %v253
    %v255 = vmul.f32 %v253, %v254
    %v256 = vsub.f32 1.0, %v255
    %v257 = vmul.f32 %v254, %v256
    %v258 = vadd.f32 %v254, %v257
    %vm259 = vweird.f32 %v253
    %vm260 = vweird.f32 %v254
    %vm261 = vmor %vm259, %vm260
    %v262 = vsel %vm261, %v254, %v258
    %v263 = vand.u32 2147483647, %v253
    %vm264 = vcmp.eq.f32.partialorder %v263, 8.507059e+37
    %v265 = vand.u32 %v253, 2147483648
    %v266 = vor.u32 1.1754944e-38, %v265
    %v267 = vsel %vm264, %v266, %v262
    %v268 = vmul.f32 1.0, %v267
    %v269 = vadd.f32 %v247, %v221
    %v270 = vxor.u32 %v269, 2147483648
    %v271 = vmul.f32 %v270, 1.442695
    %v272 = vpow.pop %v271
    %v273 = vadd.f32 %v272, 1.0
    %v274 = vrcp.pop %v273
    %v275 = vmul.f32 %v273, %v274
    %v276 = vsub.f32 1.0, %v275
    %v277 = vmul.f32 %v274, %v276
    %v278 = vadd.f32 %v274, %v277
    %vm279 = vweird.f32 %v273
    %vm280 = vweird.f32 %v274
    %vm281 = vmor %vm279, %vm280
    %v282 = vsel %vm281, %v274, %v278
    %v283 = vand.u32 2147483647, %v273
    %vm284 = vcmp.eq.f32.partialorder %v283, 8.507059e+37
    %v285 = vand.u32 %v273, 2147483648
    %v286 = vor.u32 1.1754944e-38, %v285
    %v287 = vsel %vm284, %v286, %v282
    %v288 = vmul.f32 1.0, %v287
    %v289 = vadd.f32 %v234, %v46
    %v290 = vmul.f32 %v268, %v289
    %v291 = vadd.f32 %v248, %v290
    %v292 = vtanh.pop %v291
    %v293 = vsub.f32 1.0, %v288
    %v294 = vmul.f32 %v293, %v292
    %v295 = vmul.f32 %v288, %v182
    %v296 = vadd.f32 %v294, %v295
    %v297 = vmax.f32 %v182, %v296
    %v298 = vpack.c.bf16 %v296, %v296
    %v300 = vsel %vm184, %v298, 0
    %302 = vmatpush.bf16.msra.mxu0 0
    %303 = vmatpush.bf16.msra.mxu0 0
    %304 = vmatpush.bf16.msra.mxu0 0
    %305 = vmatpush.bf16.msra.mxu0 0
    %306 = vmatpush.bf16.msra.mxu0 0
    %307 = vmatpush.bf16.msra.mxu0 0
    %308 = vmatpush.bf16.msra.mxu0 0
    %309 = vmatpush.bf16.msra.mxu0 %v190
    %310 = vmatmul.bf16.gmra.mxu0 %v300
    %v311 = vpop.f32.mrf.mxu0
    %v312 = vadd.f32 0.0, %v311
    %v313 = vpop.f32.mrf.mxu0
    %314 = vdwg.mxu0
    %315 = vmatpush.bf16.msra.mxu0 0
    %316 = vmatpush.bf16.msra.mxu0 0
    %317 = vmatpush.bf16.msra.mxu0 0
    %318 = vmatpush.bf16.msra.mxu0 0
    %319 = vmatpush.bf16.msra.mxu0 0
    %320 = vmatpush.bf16.msra.mxu0 0
    %321 = vmatpush.bf16.msra.mxu0 0
    %322 = vmatpush.bf16.msra.mxu0 %v193
    %323 = vmatmul.bf16.gmra.mxu0 %v300
    %v324 = vpop.f32.mrf.mxu0
    %v325 = vadd.f32 0.0, %v324
    %v326 = vpop.f32.mrf.mxu0
    %327 = vdwg.mxu0
    %328 = vmatpush.bf16.msra.mxu0 0
    %329 = vmatpush.bf16.msra.mxu0 0
    %330 = vmatpush.bf16.msra.mxu0 0
    %331 = vmatpush.bf16.msra.mxu0 0
    %332 = vmatpush.bf16.msra.mxu0 0
    %333 = vmatpush.bf16.msra.mxu0 0
    %334 = vmatpush.bf16.msra.mxu0 0
    %335 = vmatpush.bf16.msra.mxu0 %v196
    %336 = vmatmul.bf16.gmra.mxu0 %v300
    %v337 = vpop.f32.mrf.mxu0
    %v338 = vadd.f32 0.0, %v337
    %v339 = vpop.f32.mrf.mxu0
    %340 = vdwg.mxu0
    %v341 = vrot.slane %v96, 2
    %v342 = vrot.slane %v110, 2
    %v343 = vrot.slane %v124, 2
    %v347 = vrot.slane %v98, 1
    %v348 = vrot.slane %v112, 1
    %v349 = vrot.slane %v126, 1
    %v353 = vsel %vm73, %v341, %v347
    %v354 = vsel %vm73, %v342, %v348
    %v355 = vsel %vm73, %v343, %v349
    %v356 = vadd.f32 %v353, %v312
    %v357 = vxor.u32 %v356, 2147483648
    %v358 = vmul.f32 %v357, 1.442695
    %v359 = vpow.pop %v358
    %v360 = vadd.f32 %v359, 1.0
    %v361 = vrcp.pop %v360
    %v362 = vmul.f32 %v360, %v361
    %v363 = vsub.f32 1.0, %v362
    %v364 = vmul.f32 %v361, %v363
    %v365 = vadd.f32 %v361, %v364
    %vm366 = vweird.f32 %v360
    %vm367 = vweird.f32 %v361
    %vm368 = vmor %vm366, %vm367
    %v369 = vsel %vm368, %v361, %v365
    %v370 = vand.u32 2147483647, %v360
    %vm371 = vcmp.eq.f32.partialorder %v370, 8.507059e+37
    %v372 = vand.u32 %v360, 2147483648
    %v373 = vor.u32 1.1754944e-38, %v372
    %v374 = vsel %vm371, %v373, %v369
    %v375 = vmul.f32 1.0, %v374
    %v376 = vadd.f32 %v354, %v325
    %v377 = vxor.u32 %v376, 2147483648
    %v378 = vmul.f32 %v377, 1.442695
    %v379 = vpow.pop %v378
    %v380 = vadd.f32 %v379, 1.0
    %v381 = vrcp.pop %v380
    %v382 = vmul.f32 %v380, %v381
    %v383 = vsub.f32 1.0, %v382
    %v384 = vmul.f32 %v381, %v383
    %v385 = vadd.f32 %v381, %v384
    %vm386 = vweird.f32 %v380
    %vm387 = vweird.f32 %v381
    %vm388 = vmor %vm386, %vm387
    %v389 = vsel %vm388, %v381, %v385
    %v390 = vand.u32 2147483647, %v380
    %vm391 = vcmp.eq.f32.partialorder %v390, 8.507059e+37
    %v392 = vand.u32 %v380, 2147483648
    %v393 = vor.u32 1.1754944e-38, %v392
    %v394 = vsel %vm391, %v393, %v389
    %v395 = vmul.f32 1.0, %v394
    %v396 = vadd.f32 %v338, %v46
    %v397 = vmul.f32 %v375, %v396
    %v398 = vadd.f32 %v355, %v397
    %v399 = vtanh.pop %v398
    %v400 = vsub.f32 1.0, %v395
    %v401 = vmul.f32 %v400, %v399
    %v402 = vmul.f32 %v395, %v296
    %v403 = vadd.f32 %v401, %v402
    %v404 = vmax.f32 %v297, %v403
    %v405 = vpack.c.bf16 %v403, %v403
    %v407 = vsel %vm184, %v405, 0
    %409 = vmatpush.bf16.msra.mxu0 0
    %410 = vmatpush.bf16.msra.mxu0 0
    %411 = vmatpush.bf16.msra.mxu0 0
    %412 = vmatpush.bf16.msra.mxu0 0
    %413 = vmatpush.bf16.msra.mxu0 0
    %414 = vmatpush.bf16.msra.mxu0 0
    %415 = vmatpush.bf16.msra.mxu0 0
    %416 = vmatpush.bf16.msra.mxu0 %v190
    %417 = vmatmul.bf16.gmra.mxu0 %v407
    %v418 = vpop.f32.mrf.mxu0
    %v419 = vadd.f32 0.0, %v418
    %v420 = vpop.f32.mrf.mxu0
    %421 = vdwg.mxu0
    %422 = vmatpush.bf16.msra.mxu0 0
    %423 = vmatpush.bf16.msra.mxu0 0
    %424 = vmatpush.bf16.msra.mxu0 0
    %425 = vmatpush.bf16.msra.mxu0 0
    %426 = vmatpush.bf16.msra.mxu0 0
    %427 = vmatpush.bf16.msra.mxu0 0
    %428 = vmatpush.bf16.msra.mxu0 0
    %429 = vmatpush.bf16.msra.mxu0 %v193
    %430 = vmatmul.bf16.gmra.mxu0 %v407
    %v431 = vpop.f32.mrf.mxu0
    %v432 = vadd.f32 0.0, %v431
    %v433 = vpop.f32.mrf.mxu0
    %434 = vdwg.mxu0
    %435 = vmatpush.bf16.msra.mxu0 0
    %436 = vmatpush.bf16.msra.mxu0 0
    %437 = vmatpush.bf16.msra.mxu0 0
    %438 = vmatpush.bf16.msra.mxu0 0
    %439 = vmatpush.bf16.msra.mxu0 0
    %440 = vmatpush.bf16.msra.mxu0 0
    %441 = vmatpush.bf16.msra.mxu0 0
    %442 = vmatpush.bf16.msra.mxu0 %v196
    %443 = vmatmul.bf16.gmra.mxu0 %v407
    %v444 = vpop.f32.mrf.mxu0
    %v445 = vadd.f32 0.0, %v444
    %v446 = vpop.f32.mrf.mxu0
    %447 = vdwg.mxu0
    %v448 = vrot.slane %v96, 3
    %v449 = vrot.slane %v110, 3
    %v450 = vrot.slane %v124, 3
    %v454 = vrot.slane %v98, 2
    %v455 = vrot.slane %v112, 2
    %v456 = vrot.slane %v126, 2
    %v460 = vsel %vm73, %v448, %v454
    %v461 = vsel %vm73, %v449, %v455
    %v462 = vsel %vm73, %v450, %v456
    %v463 = vadd.f32 %v460, %v419
    %v464 = vxor.u32 %v463, 2147483648
    %v465 = vmul.f32 %v464, 1.442695
    %v466 = vpow.pop %v465
    %v467 = vadd.f32 %v466, 1.0
    %v468 = vrcp.pop %v467
    %v469 = vmul.f32 %v467, %v468
    %v470 = vsub.f32 1.0, %v469
    %v471 = vmul.f32 %v468, %v470
    %v472 = vadd.f32 %v468, %v471
    %vm473 = vweird.f32 %v467
    %vm474 = vweird.f32 %v468
    %vm475 = vmor %vm473, %vm474
    %v476 = vsel %vm475, %v468, %v472
    %v477 = vand.u32 2147483647, %v467
    %vm478 = vcmp.eq.f32.partialorder %v477, 8.507059e+37
    %v479 = vand.u32 %v467, 2147483648
    %v480 = vor.u32 1.1754944e-38, %v479
    %v481 = vsel %vm478, %v480, %v476
    %v482 = vmul.f32 1.0, %v481
    %v483 = vadd.f32 %v461, %v432
    %v484 = vxor.u32 %v483, 2147483648
    %v485 = vmul.f32 %v484, 1.442695
    %v486 = vpow.pop %v485
    %v487 = vadd.f32 %v486, 1.0
    %v488 = vrcp.pop %v487
    %v489 = vmul.f32 %v487, %v488
    %v490 = vsub.f32 1.0, %v489
    %v491 = vmul.f32 %v488, %v490
    %v492 = vadd.f32 %v488, %v491
    %vm493 = vweird.f32 %v487
    %vm494 = vweird.f32 %v488
    %vm495 = vmor %vm493, %vm494
    %v496 = vsel %vm495, %v488, %v492
    %v497 = vand.u32 2147483647, %v487
    %vm498 = vcmp.eq.f32.partialorder %v497, 8.507059e+37
    %v499 = vand.u32 %v487, 2147483648
    %v500 = vor.u32 1.1754944e-38, %v499
    %v501 = vsel %vm498, %v500, %v496
    %v502 = vmul.f32 1.0, %v501
    %v503 = vadd.f32 %v445, %v46
    %v504 = vmul.f32 %v482, %v503
    %v505 = vadd.f32 %v462, %v504
    %v506 = vtanh.pop %v505
    %v507 = vsub.f32 1.0, %v502
    %v508 = vmul.f32 %v507, %v506
    %v509 = vmul.f32 %v502, %v403
    %v510 = vadd.f32 %v508, %v509
    %v511 = vmax.f32 %v404, %v510
    %v512 = vpack.c.bf16 %v510, %v510
    %v514 = vsel %vm184, %v512, 0
    %516 = vmatpush.bf16.msra.mxu0 0
    %517 = vmatpush.bf16.msra.mxu0 0
    %518 = vmatpush.bf16.msra.mxu0 0
    %519 = vmatpush.bf16.msra.mxu0 0
    %520 = vmatpush.bf16.msra.mxu0 0
    %521 = vmatpush.bf16.msra.mxu0 0
    %522 = vmatpush.bf16.msra.mxu0 0
    %523 = vmatpush.bf16.msra.mxu0 %v190
    %524 = vmatmul.bf16.gmra.mxu0 %v514
    %v525 = vpop.f32.mrf.mxu0
    %v526 = vadd.f32 0.0, %v525
    %v527 = vpop.f32.mrf.mxu0
    %528 = vdwg.mxu0
    %529 = vmatpush.bf16.msra.mxu0 0
    %530 = vmatpush.bf16.msra.mxu0 0
    %531 = vmatpush.bf16.msra.mxu0 0
    %532 = vmatpush.bf16.msra.mxu0 0
    %533 = vmatpush.bf16.msra.mxu0 0
    %534 = vmatpush.bf16.msra.mxu0 0
    %535 = vmatpush.bf16.msra.mxu0 0
    %536 = vmatpush.bf16.msra.mxu0 %v193
    %537 = vmatmul.bf16.gmra.mxu0 %v514
    %v538 = vpop.f32.mrf.mxu0
    %v539 = vadd.f32 0.0, %v538
    %v540 = vpop.f32.mrf.mxu0
    %541 = vdwg.mxu0
    %542 = vmatpush.bf16.msra.mxu0 0
    %543 = vmatpush.bf16.msra.mxu0 0
    %544 = vmatpush.bf16.msra.mxu0 0
    %545 = vmatpush.bf16.msra.mxu0 0
    %546 = vmatpush.bf16.msra.mxu0 0
    %547 = vmatpush.bf16.msra.mxu0 0
    %548 = vmatpush.bf16.msra.mxu0 0
    %549 = vmatpush.bf16.msra.mxu0 %v196
    %550 = vmatmul.bf16.gmra.mxu0 %v514
    %v551 = vpop.f32.mrf.mxu0
    %v552 = vadd.f32 0.0, %v551
    %v553 = vpop.f32.mrf.mxu0
    %554 = vdwg.mxu0
    %v555 = vrot.slane %v96, 4
    %v556 = vrot.slane %v110, 4
    %v557 = vrot.slane %v124, 4
    %v561 = vrot.slane %v98, 3
    %v562 = vrot.slane %v112, 3
    %v563 = vrot.slane %v126, 3
    %v567 = vsel %vm73, %v555, %v561
    %v568 = vsel %vm73, %v556, %v562
    %v569 = vsel %vm73, %v557, %v563
    %v570 = vadd.f32 %v567, %v526
    %v571 = vxor.u32 %v570, 2147483648
    %v572 = vmul.f32 %v571, 1.442695
    %v573 = vpow.pop %v572
    %v574 = vadd.f32 %v573, 1.0
    %v575 = vrcp.pop %v574
    %v576 = vmul.f32 %v574, %v575
    %v577 = vsub.f32 1.0, %v576
    %v578 = vmul.f32 %v575, %v577
    %v579 = vadd.f32 %v575, %v578
    %vm580 = vweird.f32 %v574
    %vm581 = vweird.f32 %v575
    %vm582 = vmor %vm580, %vm581
    %v583 = vsel %vm582, %v575, %v579
    %v584 = vand.u32 2147483647, %v574
    %vm585 = vcmp.eq.f32.partialorder %v584, 8.507059e+37
    %v586 = vand.u32 %v574, 2147483648
    %v587 = vor.u32 1.1754944e-38, %v586
    %v588 = vsel %vm585, %v587, %v583
    %v589 = vmul.f32 1.0, %v588
    %v590 = vadd.f32 %v568, %v539
    %v591 = vxor.u32 %v590, 2147483648
    %v592 = vmul.f32 %v591, 1.442695
    %v593 = vpow.pop %v592
    %v594 = vadd.f32 %v593, 1.0
    %v595 = vrcp.pop %v594
    %v596 = vmul.f32 %v594, %v595
    %v597 = vsub.f32 1.0, %v596
    %v598 = vmul.f32 %v595, %v597
    %v599 = vadd.f32 %v595, %v598
    %vm600 = vweird.f32 %v594
    %vm601 = vweird.f32 %v595
    %vm602 = vmor %vm600, %vm601
    %v603 = vsel %vm602, %v595, %v599
    %v604 = vand.u32 2147483647, %v594
    %vm605 = vcmp.eq.f32.partialorder %v604, 8.507059e+37
    %v606 = vand.u32 %v594, 2147483648
    %v607 = vor.u32 1.1754944e-38, %v606
    %v608 = vsel %vm605, %v607, %v603
    %v609 = vmul.f32 1.0, %v608
    %v610 = vadd.f32 %v552, %v46
    %v611 = vmul.f32 %v589, %v610
    %v612 = vadd.f32 %v569, %v611
    %v613 = vtanh.pop %v612
    %v614 = vsub.f32 1.0, %v609
    %v615 = vmul.f32 %v614, %v613
    %v616 = vmul.f32 %v609, %v510
    %v617 = vadd.f32 %v615, %v616
    %v618 = vmax.f32 %v511, %v617
    %v619 = vpack.c.bf16 %v617, %v617
    %v621 = vsel %vm184, %v619, 0
    %623 = vmatpush.bf16.msra.mxu0 0
    %624 = vmatpush.bf16.msra.mxu0 0
    %625 = vmatpush.bf16.msra.mxu0 0
    %626 = vmatpush.bf16.msra.mxu0 0
    %627 = vmatpush.bf16.msra.mxu0 0
    %628 = vmatpush.bf16.msra.mxu0 0
    %629 = vmatpush.bf16.msra.mxu0 0
    %630 = vmatpush.bf16.msra.mxu0 %v190
    %631 = vmatmul.bf16.gmra.mxu0 %v621
    %v632 = vpop.f32.mrf.mxu0
    %v633 = vadd.f32 0.0, %v632
    %v634 = vpop.f32.mrf.mxu0
    %635 = vdwg.mxu0
    %636 = vmatpush.bf16.msra.mxu0 0
    %637 = vmatpush.bf16.msra.mxu0 0
    %638 = vmatpush.bf16.msra.mxu0 0
    %639 = vmatpush.bf16.msra.mxu0 0
    %640 = vmatpush.bf16.msra.mxu0 0
    %641 = vmatpush.bf16.msra.mxu0 0
    %642 = vmatpush.bf16.msra.mxu0 0
    %643 = vmatpush.bf16.msra.mxu0 %v193
    %644 = vmatmul.bf16.gmra.mxu0 %v621
    %v645 = vpop.f32.mrf.mxu0
    %v646 = vadd.f32 0.0, %v645
    %v647 = vpop.f32.mrf.mxu0
    %648 = vdwg.mxu0
    %649 = vmatpush.bf16.msra.mxu0 0
    %650 = vmatpush.bf16.msra.mxu0 0
    %651 = vmatpush.bf16.msra.mxu0 0
    %652 = vmatpush.bf16.msra.mxu0 0
    %653 = vmatpush.bf16.msra.mxu0 0
    %654 = vmatpush.bf16.msra.mxu0 0
    %655 = vmatpush.bf16.msra.mxu0 0
    %656 = vmatpush.bf16.msra.mxu0 %v196
    %657 = vmatmul.bf16.gmra.mxu0 %v621
    %v658 = vpop.f32.mrf.mxu0
    %v659 = vadd.f32 0.0, %v658
    %v660 = vpop.f32.mrf.mxu0
    %661 = vdwg.mxu0
    %v662 = vrot.slane %v96, 5
    %v663 = vrot.slane %v110, 5
    %v664 = vrot.slane %v124, 5
    %v668 = vrot.slane %v98, 4
    %v669 = vrot.slane %v112, 4
    %v670 = vrot.slane %v126, 4
    %v674 = vsel %vm73, %v662, %v668
    %v675 = vsel %vm73, %v663, %v669
    %v676 = vsel %vm73, %v664, %v670
    %v677 = vadd.f32 %v674, %v633
    %v678 = vxor.u32 %v677, 2147483648
    %v679 = vmul.f32 %v678, 1.442695
    %v680 = vpow.pop %v679
    %v681 = vadd.f32 %v680, 1.0
    %v682 = vrcp.pop %v681
    %v683 = vmul.f32 %v681, %v682
    %v684 = vsub.f32 1.0, %v683
    %v685 = vmul.f32 %v682, %v684
    %v686 = vadd.f32 %v682, %v685
    %vm687 = vweird.f32 %v681
    %vm688 = vweird.f32 %v682
    %vm689 = vmor %vm687, %vm688
    %v690 = vsel %vm689, %v682, %v686
    %v691 = vand.u32 2147483647, %v681
    %vm692 = vcmp.eq.f32.partialorder %v691, 8.507059e+37
    %v693 = vand.u32 %v681, 2147483648
    %v694 = vor.u32 1.1754944e-38, %v693
    %v695 = vsel %vm692, %v694, %v690
    %v696 = vmul.f32 1.0, %v695
    %v697 = vadd.f32 %v675, %v646
    %v698 = vxor.u32 %v697, 2147483648
    %v699 = vmul.f32 %v698, 1.442695
    %v700 = vpow.pop %v699
    %v701 = vadd.f32 %v700, 1.0
    %v702 = vrcp.pop %v701
    %v703 = vmul.f32 %v701, %v702
    %v704 = vsub.f32 1.0, %v703
    %v705 = vmul.f32 %v702, %v704
    %v706 = vadd.f32 %v702, %v705
    %vm707 = vweird.f32 %v701
    %vm708 = vweird.f32 %v702
    %vm709 = vmor %vm707, %vm708
    %v710 = vsel %vm709, %v702, %v706
    %v711 = vand.u32 2147483647, %v701
    %vm712 = vcmp.eq.f32.partialorder %v711, 8.507059e+37
    %v713 = vand.u32 %v701, 2147483648
    %v714 = vor.u32 1.1754944e-38, %v713
    %v715 = vsel %vm712, %v714, %v710
    %v716 = vmul.f32 1.0, %v715
    %v717 = vadd.f32 %v659, %v46
    %v718 = vmul.f32 %v696, %v717
    %v719 = vadd.f32 %v676, %v718
    %v720 = vtanh.pop %v719
    %v721 = vsub.f32 1.0, %v716
    %v722 = vmul.f32 %v721, %v720
    %v723 = vmul.f32 %v716, %v617
    %v724 = vadd.f32 %v722, %v723
    %v725 = vmax.f32 %v618, %v724
    %v726 = vpack.c.bf16 %v724, %v724
    %v728 = vsel %vm184, %v726, 0
    %730 = vmatpush.bf16.msra.mxu0 0
    %731 = vmatpush.bf16.msra.mxu0 0
    %732 = vmatpush.bf16.msra.mxu0 0
    %733 = vmatpush.bf16.msra.mxu0 0
    %734 = vmatpush.bf16.msra.mxu0 0
    %735 = vmatpush.bf16.msra.mxu0 0
    %736 = vmatpush.bf16.msra.mxu0 0
    %737 = vmatpush.bf16.msra.mxu0 %v190
    %738 = vmatmul.bf16.gmra.mxu0 %v728
    %v739 = vpop.f32.mrf.mxu0
    %v740 = vadd.f32 0.0, %v739
    %v741 = vpop.f32.mrf.mxu0
    %742 = vdwg.mxu0
    %743 = vmatpush.bf16.msra.mxu0 0
    %744 = vmatpush.bf16.msra.mxu0 0
    %745 = vmatpush.bf16.msra.mxu0 0
    %746 = vmatpush.bf16.msra.mxu0 0
    %747 = vmatpush.bf16.msra.mxu0 0
    %748 = vmatpush.bf16.msra.mxu0 0
    %749 = vmatpush.bf16.msra.mxu0 0
    %750 = vmatpush.bf16.msra.mxu0 %v193
    %751 = vmatmul.bf16.gmra.mxu0 %v728
    %v752 = vpop.f32.mrf.mxu0
    %v753 = vadd.f32 0.0, %v752
    %v754 = vpop.f32.mrf.mxu0
    %755 = vdwg.mxu0
    %756 = vmatpush.bf16.msra.mxu0 0
    %757 = vmatpush.bf16.msra.mxu0 0
    %758 = vmatpush.bf16.msra.mxu0 0
    %759 = vmatpush.bf16.msra.mxu0 0
    %760 = vmatpush.bf16.msra.mxu0 0
    %761 = vmatpush.bf16.msra.mxu0 0
    %762 = vmatpush.bf16.msra.mxu0 0
    %763 = vmatpush.bf16.msra.mxu0 %v196
    %764 = vmatmul.bf16.gmra.mxu0 %v728
    %v765 = vpop.f32.mrf.mxu0
    %v766 = vadd.f32 0.0, %v765
    %v767 = vpop.f32.mrf.mxu0
    %768 = vdwg.mxu0
    %v769 = vrot.slane %v96, 6
    %v770 = vrot.slane %v110, 6
    %v771 = vrot.slane %v124, 6
    %v775 = vrot.slane %v98, 5
    %v776 = vrot.slane %v112, 5
    %v777 = vrot.slane %v126, 5
    %v781 = vsel %vm73, %v769, %v775
    %v782 = vsel %vm73, %v770, %v776
    %v783 = vsel %vm73, %v771, %v777
    %v784 = vadd.f32 %v781, %v740
    %v785 = vxor.u32 %v784, 2147483648
    %v786 = vmul.f32 %v785, 1.442695
    %v787 = vpow.pop %v786
    %v788 = vadd.f32 %v787, 1.0
    %v789 = vrcp.pop %v788
    %v790 = vmul.f32 %v788, %v789
    %v791 = vsub.f32 1.0, %v790
    %v792 = vmul.f32 %v789, %v791
    %v793 = vadd.f32 %v789, %v792
    %vm794 = vweird.f32 %v788
    %vm795 = vweird.f32 %v789
    %vm796 = vmor %vm794, %vm795
    %v797 = vsel %vm796, %v789, %v793
    %v798 = vand.u32 2147483647, %v788
    %vm799 = vcmp.eq.f32.partialorder %v798, 8.507059e+37
    %v800 = vand.u32 %v788, 2147483648
    %v801 = vor.u32 1.1754944e-38, %v800
    %v802 = vsel %vm799, %v801, %v797
    %v803 = vmul.f32 1.0, %v802
    %v804 = vadd.f32 %v782, %v753
    %v805 = vxor.u32 %v804, 2147483648
    %v806 = vmul.f32 %v805, 1.442695
    %v807 = vpow.pop %v806
    %v808 = vadd.f32 %v807, 1.0
    %v809 = vrcp.pop %v808
    %v810 = vmul.f32 %v808, %v809
    %v811 = vsub.f32 1.0, %v810
    %v812 = vmul.f32 %v809, %v811
    %v813 = vadd.f32 %v809, %v812
    %vm814 = vweird.f32 %v808
    %vm815 = vweird.f32 %v809
    %vm816 = vmor %vm814, %vm815
    %v817 = vsel %vm816, %v809, %v813
    %v818 = vand.u32 2147483647, %v808
    %vm819 = vcmp.eq.f32.partialorder %v818, 8.507059e+37
    %v820 = vand.u32 %v808, 2147483648
    %v821 = vor.u32 1.1754944e-38, %v820
    %v822 = vsel %vm819, %v821, %v817
    %v823 = vmul.f32 1.0, %v822
    %v824 = vadd.f32 %v766, %v46
    %v825 = vmul.f32 %v803, %v824
    %v826 = vadd.f32 %v783, %v825
    %v827 = vtanh.pop %v826
    %v828 = vsub.f32 1.0, %v823
    %v829 = vmul.f32 %v828, %v827
    %v830 = vmul.f32 %v823, %v724
    %v831 = vadd.f32 %v829, %v830
    %v832 = vmax.f32 %v725, %v831
    %v833 = vpack.c.bf16 %v831, %v831
    %v835 = vsel %vm184, %v833, 0
    %837 = vmatpush.bf16.msra.mxu0 0
    %838 = vmatpush.bf16.msra.mxu0 0
    %839 = vmatpush.bf16.msra.mxu0 0
    %840 = vmatpush.bf16.msra.mxu0 0
    %841 = vmatpush.bf16.msra.mxu0 0
    %842 = vmatpush.bf16.msra.mxu0 0
    %843 = vmatpush.bf16.msra.mxu0 0
    %844 = vmatpush.bf16.msra.mxu0 %v190
    %845 = vmatmul.bf16.gmra.mxu0 %v835
    %v846 = vpop.f32.mrf.mxu0
    %v847 = vadd.f32 0.0, %v846
    %v848 = vpop.f32.mrf.mxu0
    %849 = vdwg.mxu0
    %850 = vmatpush.bf16.msra.mxu0 0
    %851 = vmatpush.bf16.msra.mxu0 0
    %852 = vmatpush.bf16.msra.mxu0 0
    %853 = vmatpush.bf16.msra.mxu0 0
    %854 = vmatpush.bf16.msra.mxu0 0
    %855 = vmatpush.bf16.msra.mxu0 0
    %856 = vmatpush.bf16.msra.mxu0 0
    %857 = vmatpush.bf16.msra.mxu0 %v193
    %858 = vmatmul.bf16.gmra.mxu0 %v835
    %v859 = vpop.f32.mrf.mxu0
    %v860 = vadd.f32 0.0, %v859
    %v861 = vpop.f32.mrf.mxu0
    %862 = vdwg.mxu0
    %863 = vmatpush.bf16.msra.mxu0 0
    %864 = vmatpush.bf16.msra.mxu0 0
    %865 = vmatpush.bf16.msra.mxu0 0
    %866 = vmatpush.bf16.msra.mxu0 0
    %867 = vmatpush.bf16.msra.mxu0 0
    %868 = vmatpush.bf16.msra.mxu0 0
    %869 = vmatpush.bf16.msra.mxu0 0
    %870 = vmatpush.bf16.msra.mxu0 %v196
    %871 = vmatmul.bf16.gmra.mxu0 %v835
    %v872 = vpop.f32.mrf.mxu0
    %v873 = vadd.f32 0.0, %v872
    %v874 = vpop.f32.mrf.mxu0
    %875 = vdwg.mxu0
    %v876 = vrot.slane %v96, 7
    %v877 = vrot.slane %v110, 7
    %v878 = vrot.slane %v124, 7
    %v882 = vrot.slane %v98, 6
    %v883 = vrot.slane %v112, 6
    %v884 = vrot.slane %v126, 6
    %v888 = vsel %vm73, %v876, %v882
    %v889 = vsel %vm73, %v877, %v883
    %v890 = vsel %vm73, %v878, %v884
    %v891 = vadd.f32 %v888, %v847
    %v892 = vxor.u32 %v891, 2147483648
    %v893 = vmul.f32 %v892, 1.442695
    %v894 = vpow.pop %v893
    %v895 = vadd.f32 %v894, 1.0
    %v896 = vrcp.pop %v895
    %v897 = vmul.f32 %v895, %v896
    %v898 = vsub.f32 1.0, %v897
    %v899 = vmul.f32 %v896, %v898
    %v900 = vadd.f32 %v896, %v899
    %vm901 = vweird.f32 %v895
    %vm902 = vweird.f32 %v896
    %vm903 = vmor %vm901, %vm902
    %v904 = vsel %vm903, %v896, %v900
    %v905 = vand.u32 2147483647, %v895
    %vm906 = vcmp.eq.f32.partialorder %v905, 8.507059e+37
    %v907 = vand.u32 %v895, 2147483648
    %v908 = vor.u32 1.1754944e-38, %v907
    %v909 = vsel %vm906, %v908, %v904
    %v910 = vmul.f32 1.0, %v909
    %v911 = vadd.f32 %v889, %v860
    %v912 = vxor.u32 %v911, 2147483648
    %v913 = vmul.f32 %v912, 1.442695
    %v914 = vpow.pop %v913
    %v915 = vadd.f32 %v914, 1.0
    %v916 = vrcp.pop %v915
    %v917 = vmul.f32 %v915, %v916
    %v918 = vsub.f32 1.0, %v917
    %v919 = vmul.f32 %v916, %v918
    %v920 = vadd.f32 %v916, %v919
    %vm921 = vweird.f32 %v915
    %vm922 = vweird.f32 %v916
    %vm923 = vmor %vm921, %vm922
    %v924 = vsel %vm923, %v916, %v920
    %v925 = vand.u32 2147483647, %v915
    %vm926 = vcmp.eq.f32.partialorder %v925, 8.507059e+37
    %v927 = vand.u32 %v915, 2147483648
    %v928 = vor.u32 1.1754944e-38, %v927
    %v929 = vsel %vm926, %v928, %v924
    %v930 = vmul.f32 1.0, %v929
    %v931 = vadd.f32 %v873, %v46
    %v932 = vmul.f32 %v910, %v931
    %v933 = vadd.f32 %v890, %v932
    %v934 = vtanh.pop %v933
    %v935 = vsub.f32 1.0, %v930
    %v936 = vmul.f32 %v935, %v934
    %v937 = vmul.f32 %v930, %v831
    %v938 = vadd.f32 %v936, %v937
    %v939 = vmax.f32 %v832, %v938
    %v941 = vsel %vm184, %v939, 0
    %v944 = vsel %vm74, %v51, 0
    %946 = vmatpush.msra.mxu0 0.0
    %947 = vmatpush.msra.mxu0 0.0
    %948 = vmatpush.msra.mxu0 0.0
    %949 = vmatpush.msra.mxu0 0.0
    %950 = vmatpush.msra.mxu0 0.0
    %951 = vmatpush.msra.mxu0 0.0
    %952 = vmatpush.msra.mxu0 0.0
    %953 = vmatpush.msra.mxu0 0.0
    %954 = vmatpush.msra.mxu0 0.0
    %955 = vmatpush.msra.mxu0 0.0
    %956 = vmatpush.msra.mxu0 0.0
    %957 = vmatpush.msra.mxu0 0.0
    %958 = vmatpush.msra.mxu0 0.0
    %959 = vmatpush.msra.mxu0 0.0
    %960 = vmatpush.msra.mxu0 %v944
    %961 = vmatpush.msra.mxu0 %v50
    %962 = vmatmul.f32.gmra.mxu0 %v941
    %v963 = vpop.f32.mrf.mxu0
    %v964 = vadd.f32 %v47, %v963
    %965 = vdwg.mxu0
    %v966 = vmax.f32 %v964, 0.0
    %vm967 = vcmask 162816
    %v969 = vsel %vm967, %v966, 0
    %vm971 = vcmask 1043456
    %v973 = vsel %vm971, %v54, 0
    %975 = vmatpush.msra.mxu0 0.0
    %976 = vmatpush.msra.mxu0 0.0
    %977 = vmatpush.msra.mxu0 0.0
    %978 = vmatpush.msra.mxu0 0.0
    %979 = vmatpush.msra.mxu0 0.0
    %980 = vmatpush.msra.mxu0 0.0
    %981 = vmatpush.msra.mxu0 0.0
    %982 = vmatpush.msra.mxu0 0.0
    %983 = vmatpush.msra.mxu0 0.0
    %984 = vmatpush.msra.mxu0 0.0
    %985 = vmatpush.msra.mxu0 0.0
    %986 = vmatpush.msra.mxu0 0.0
    %987 = vmatpush.msra.mxu0 0.0
    %988 = vmatpush.msra.mxu0 %v973
    %989 = vmatpush.msra.mxu0 %v53
    %990 = vmatpush.msra.mxu0 %v52
    %991 = vmatmul.f32.gmra.mxu0 %v969
    %v992 = vpop.f32.mrf.mxu0
    %v993 = vadd.f32 %v48, %v992
    %994 = vdwg.mxu0
    %v995 = vmax.f32 %v993, 0.0
    %v997 = vsel %vm967, %v995, 0
    %v1000 = vsel %vm971, %v57, 0
    %1002 = vmatpush.msra.mxu0 0.0
    %1003 = vmatpush.msra.mxu0 0.0
    %1004 = vmatpush.msra.mxu0 0.0
    %1005 = vmatpush.msra.mxu0 0.0
    %1006 = vmatpush.msra.mxu0 0.0
    %1007 = vmatpush.msra.mxu0 0.0
    %1008 = vmatpush.msra.mxu0 0.0
    %1009 = vmatpush.msra.mxu0 0.0
    %1010 = vmatpush.msra.mxu0 0.0
    %1011 = vmatpush.msra.mxu0 0.0
    %1012 = vmatpush.msra.mxu0 0.0
    %1013 = vmatpush.msra.mxu0 0.0
    %1014 = vmatpush.msra.mxu0 0.0
    %1015 = vmatpush.msra.mxu0 %v1000
    %1016 = vmatpush.msra.mxu0 %v56
    %1017 = vmatpush.msra.mxu0 %v55
    %1018 = vmatmul.f32.gmra.mxu0 %v997
    %v1019 = vpop.f32.mrf.mxu0
    %v1020 = vadd.f32 %v49, %v1019
    %1021 = vdwg.mxu0
    %vm1022 = vcmask 17408
    %1023 = vst.msk [vmem:[#allocation5] sm:$0x3] %vm1022, %v1020
    // Predicated region
    $region14: #{_forward.1} parent=1 // pred_check
      _
    $region15: #{_forward.1} parent=1 // pred_check_branch
      %1025 = sbr.rel (0) target = $region17
    $region16: #{_forward.1} parent=1 // pred_region
      %1027 = vsyncadd [#allocation4], 0
      %s1029 = sshll.u32 [#allocation5], 4
      %s1030 = int_to_ptr.vmem [resolvable:$true] %s1029
      %s1031 = sshll.u32 %s2, 4
      %s1032 = int_to_ptr.hbm [resolvable:$true] %s1031
      %1034 = dma.vmem_to_hbm [thread:$0]  %s1030, 32, %s1032, [#allocation4]
    $region17: #{_forward.1} parent=1 // pred_fallthru
      _
    // Predicated region
    $region18: #{_forward.1} parent=1 // pred_check
      _
    $region19: #{_forward.1} parent=1 // pred_check_branch
      %1036 = sbr.rel (0) target = $region21
    $region20: #{_forward.1} parent=1 // pred_region
      %1038 = dma.done [#allocation4], 32
    $region21: #{_forward.1} parent=1 // pred_fallthru
      _
    %1039 = vsyncpa [#allocation3], 1
    %1040 = vsyncpa [#allocation4], 1

</llo_original>
